<compile_context>
chip_gen: v5e
topology: v5e:2x2
jax: 0.10.0
libtpu: 0.0.40
codegen_flags: <defaults>
</compile_context>

<pallas_src>
import functools

import jax
import jax.numpy as jnp
from jax import lax
from jax.experimental import pallas as pl
from jax.experimental.pallas import tpu as pltpu


def _round_up(x: int, m: int) -> int:
    return (x + m - 1) // m * m


def _cdiv(a: int, b: int) -> int:
    return -(-a // b)


# -----------------------------------------------------------------------------
# Kernel: grid = (token_tiles, layer_blocks).  One step processes `lpb` layers
# for one token tile.  out_ref is the residual carry (same block across the
# inner layer-block axis) and the final output.
# -----------------------------------------------------------------------------
def _residual_mlp_kernel(
    x_ref,        # (TN, Dp)            f32   initial input
    wf1_ref,      # (lpb, Dp, 2Hp+Rp)   bf16  [W1 | G1W | A1]
    bf1_ref,      # (lpb, 1, 2Hp+Rp)    f32   [b1 | g1b | 0]
    bb1_ref,      # (lpb, Rp, Hp)       bf16  lora_b1 * scaling (zero-padded rows)
    wf2_ref,      # (lpb, Hp, 2Dp+Rp)   bf16  [W2 | G2W | A2]
    bf2_ref,      # (lpb, 1, 2Dp+Rp)    f32   [b2 | g2b | 0]
    bb2_ref,      # (lpb, Rp, Dp)       bf16  lora_b2 * scaling
    out_ref,      # (TN, Dp)            f32   residual carry / final output
    *,
    hp: int,
    dp: int,
    lpb: int,
    n_lblocks: int,
):
    if n_lblocks == 1:
        # Weights fully resident: single inner step, read input directly.
        x = x_ref[...]
    else:
        g = pl.program_id(1)
        # Avoid store-then-reload: read from x at the first layer block,
        # otherwise continue from the resident carry in out_ref.
        x = lax.cond(g == 0, lambda: x_ref[...], lambda: out_ref[...])

    for j in range(lpb):
        x_in = x
        xb = x.astype(jnp.bfloat16)

        # ---- fc1: fused [base | gate_pre | lora_a] --------------------------
        f1 = jnp.dot(xb, wf1_ref[j], preferred_element_type=jnp.float32) + bf1_ref[j]
        base1 = f1[:, :hp]
        # sigmoid(z) == 0.5*tanh(0.5*z) + 0.5  (single EUP op)
        gate1 = 0.5 * jnp.tanh(0.5 * f1[:, hp:2 * hp]) + 0.5
        lora1 = jnp.dot(f1[:, 2 * hp:].astype(jnp.bfloat16), bb1_ref[j],
                        preferred_element_type=jnp.float32)
        # dropout1 is identity in eval mode; activation = tanh (module default)
        h = jnp.tanh(base1 + lora1 * gate1)

        # ---- fc2: fused [base | gate_pre | lora_a] --------------------------
        hb = h.astype(jnp.bfloat16)
        f2 = jnp.dot(hb, wf2_ref[j], preferred_element_type=jnp.float32) + bf2_ref[j]
        base2 = f2[:, :dp]
        gate2 = 0.5 * jnp.tanh(0.5 * f2[:, dp:2 * dp]) + 0.5
        lora2 = jnp.dot(f2[:, 2 * dp:].astype(jnp.bfloat16), bb2_ref[j],
                        preferred_element_type=jnp.float32)

        # residual: x = layer(x) + input_x
        x = base2 + lora2 * gate2 + x_in

    out_ref[...] = x


# -----------------------------------------------------------------------------
# Parameter packing: pad features to 128-lane multiples (including the LoRA
# tail), fuse shared-LHS weights, fold scaling into lora_b, cast to bf16.
# -----------------------------------------------------------------------------
def _pack_params(params, scaling: float, dp: int, hp: int, rp: int):
    L = params["w1"].shape[0]

    def pad3(w, rows, cols):
        w = w.astype(jnp.float32)
        return jnp.pad(w, ((0, 0), (0, rows - w.shape[1]), (0, cols - w.shape[2])))

    # fc1 (D -> H)
    wf1 = jnp.concatenate(
        [pad3(params["w1"], dp, hp),
         pad3(params["g1w"], dp, hp),
         pad3(params["a1"], dp, rp)], axis=2
    ).astype(jnp.bfloat16)                                        # (L, Dp, 2Hp+Rp)
    bf1 = jnp.concatenate(
        [pad3(params["b1"], 1, hp),
         pad3(params["g1b"], 1, hp),
         jnp.zeros((L, 1, rp), jnp.float32)], axis=2
    )                                                             # (L, 1, 2Hp+Rp)
    bb1 = (pad3(params["bb1"], rp, hp) * scaling).astype(jnp.bfloat16)   # (L, Rp, Hp)

    # fc2 (H -> D)
    wf2 = jnp.concatenate(
        [pad3(params["w2"], hp, dp),
         pad3(params["g2w"], hp, dp),
         pad3(params["a2"], hp, rp)], axis=2
    ).astype(jnp.bfloat16)                                        # (L, Hp, 2Dp+Rp)
    bf2 = jnp.concatenate(
        [pad3(params["b2"], 1, dp),
         pad3(params["g2b"], 1, dp),
         jnp.zeros((L, 1, rp), jnp.float32)], axis=2
    )                                                             # (L, 1, 2Dp+Rp)
    bb2 = (pad3(params["bb2"], rp, dp) * scaling).astype(jnp.bfloat16)   # (L, Rp, Dp)

    return wf1, bf1, bb1, wf2, bf2, bb2


# -----------------------------------------------------------------------------
# Wrapper
# -----------------------------------------------------------------------------
def residual_mlp_pallas(x, params, *, scaling: float, token_tile: int = 512):
    """x: (N, D) float32.  params: dict of per-layer-stacked (transposed) weights."""
    N, D = x.shape
    L, _, H = params["w1"].shape
    R = params["a1"].shape[-1]

    dp = _round_up(D, 128)           # lane-dense feature dims
    hp = _round_up(H, 128)
    rp = _round_up(R, 128)           # lane-aligned LoRA tail of the fused matmuls

    # Token tiling: split N as evenly as possible (minimal remainder padding).
    # NOTE(v7x): for medium N prefer >=2 tiles so the "parallel" axis feeds both
    # TensorCores; for N <= token_tile a single tile is used.
    n_tiles = max(1, _cdiv(N, token_tile))
    tn = _round_up(_cdiv(N, n_tiles), 8)
    n_pad = n_tiles * tn

    x_p = jnp.pad(x.astype(jnp.float32), ((0, n_pad - N), (0, dp - D)))
    wf1, bf1, bb1, wf2, bf2, bb2 = _pack_params(params, scaling, dp, hp, rp)

    w1_width = 2 * hp + rp
    w2_width = 2 * dp + rp

    # --- generation-aware VMEM budget ---------------------------------------
    try:
        vmem_cap = int(getattr(pltpu.get_tpu_info(), "vmem_capacity_bytes",
                               128 * 1024 * 1024))
    except Exception:  # interpret mode / CPU AOT etc.
        vmem_cap = 64 * 1024 * 1024
    vmem_limit = min(int(vmem_cap * 0.70), 96 * 1024 * 1024)

    # --- choose how many layers are VMEM-resident per grid step -------------
    per_layer_w_bytes = ((dp * w1_width + hp * w2_width + rp * (hp + dp)) * 2
                         + (w1_width + w2_width) * 4)
    # rough per-tile f32 activation/intermediate footprint (x, carry, f1, f2, h)
    act_bytes = 4 * tn * (4 * dp + 2 * (w1_width + w2_width) + hp)
    budget = int(vmem_limit * 0.8)

    lpb = 1
    for d in range(L, 0, -1):
        # factor 2: Pallas double-buffers each input block by default
        if L % d == 0 and 2 * d * per_layer_w_bytes + act_bytes <= budget:
            lpb = d
            break
    n_lblocks = L // lpb

    act_spec = pl.BlockSpec((tn, dp), lambda i, g: (i, 0))

    def wspec(shape):
        # block index depends only on the layer-block axis; when n_lblocks == 1
        # the index is constant -> weights are DMA'd once and stay resident.
        return pl.BlockSpec((lpb,) + shape, lambda i, g: (g, 0, 0))

    kernel = functools.partial(_residual_mlp_kernel, hp=hp, dp=dp,
                               lpb=lpb, n_lblocks=n_lblocks)

    out = pl.pallas_call(
        kernel,
        out_shape=jax.ShapeDtypeStruct((n_pad, dp), jnp.float32),
        grid_spec=pltpu.PrefetchScalarGridSpec(
            num_scalar_prefetch=0,
            grid=(n_tiles, n_lblocks),
            in_specs=[
                act_spec,                     # x
                wspec((dp, w1_width)),        # Wf1 = [W1 | G1W | A1]
                wspec((1, w1_width)),         # bf1 = [b1 | g1b | 0]
                wspec((rp, hp)),              # lora_b1 * scaling
                wspec((hp, w2_width)),        # Wf2 = [W2 | G2W | A2]
                wspec((1, w2_width)),         # bf2 = [b2 | g2b | 0]
                wspec((rp, dp)),              # lora_b2 * scaling
            ],
            out_specs=act_spec,
        ),
        compiler_params=pltpu.CompilerParams(
            # tokens: megacore-parallel (v7x); layer blocks: sequential carry
            dimension_semantics=("parallel", "arbitrary"),
            vmem_limit_bytes=vmem_limit,
        ),
    )(x_p, wf1, bf1, bb1, wf2, bf2, bb2)

    return out[:N, :D]


# -----------------------------------------------------------------------------
# Pure-JAX reference (mirrors the PyTorch forward, eval mode).
# matmul_dtype=bf16 emulates the kernel's MXU dtype for tight comparison.
# -----------------------------------------------------------------------------
def residual_mlp_ref(x, params, *, scaling: float, matmul_dtype=jnp.float32):
    def mm(a, w):
        return jnp.dot(a.astype(matmul_dtype), w.astype(matmul_dtype),
                       preferred_element_type=jnp.float32)

    L = params["w1"].shape[0]
    for l in range(L):
        x_in = x
        base1 = mm(x, params["w1"][l]) + params["b1"][l]
        gate1 = jax.nn.sigmoid(mm(x, params["g1w"][l]) + params["g1b"][l])
        lora1 = mm(mm(x, params["a1"][l]), params["bb1"][l] * scaling)
        h = jnp.tanh(base1 + lora1 * gate1)
        base2 = mm(h, params["w2"][l]) + params["b2"][l]
        gate2 = jax.nn.sigmoid(mm(h, params["g2w"][l]) + params["g2b"][l])
        lora2 = mm(mm(h, params["a2"][l]), params["bb2"][l] * scaling)
        x = base2 + lora2 * gate2 + x_in
    return x


if __name__ == "__main__":
    # Small deterministic config: dim=32, hidden=64, num_layers=3, lora_rank=8,
    # lora_alpha=32 (scaling=4.0), gating_function='sigmoid', batch of 8 tokens.
    N, D, H, R, L = 8, 32, 64, 8, 3
    scaling = 32 / R

    key = jax.random.PRNGKey(0)
    ks = jax.random.split(key, 13)
    s = 0.1  # small deterministic init
    # NOTE: PyTorch inits lora_b to zeros; we use a small nonzero init so the
    # LoRA path is actually exercised numerically.
    params = {
        "w1":  s * jax.random.normal(ks[0],  (L, D, H), jnp.float32),
        "b1":  s * jax.random.normal(ks[1],  (L, 1, H), jnp.float32),
        "a1":  s * jax.random.normal(ks[2],  (L, D, R), jnp.float32),
        "bb1": s * jax.random.normal(ks[3],  (L, R, H), jnp.float32),
        "g1w": s * jax.random.normal(ks[4],  (L, D, H), jnp.float32),
        "g1b": s * jax.random.normal(ks[5],  (L, 1, H), jnp.float32),
        "w2":  s * jax.random.normal(ks[6],  (L, H, D), jnp.float32),
        "b2":  s * jax.random.normal(ks[7],  (L, 1, D), jnp.float32),
        "a2":  s * jax.random.normal(ks[8],  (L, H, R), jnp.float32),
        "bb2": s * jax.random.normal(ks[9],  (L, R, D), jnp.float32),
        "g2w": s * jax.random.normal(ks[10], (L, H, D), jnp.float32),
        "g2b": s * jax.random.normal(ks[11], (L, 1, D), jnp.float32),
    }
    x = jax.random.normal(ks[12], (N, D), jnp.float32)

    out = residual_mlp_pallas(x, params, scaling=scaling)
    out = jax.block_until_ready(out)

    ref_bf16 = residual_mlp_ref(x, params, scaling=scaling, matmul_dtype=jnp.bfloat16)
    ref_f32 = residual_mlp_ref(x, params, scaling=scaling, matmul_dtype=jnp.float32)

    assert out.shape == (N, D)
    # Tight check vs a reference that uses the same bf16 MXU matmuls.
    assert jnp.allclose(out, ref_bf16, atol=2e-3, rtol=2e-3), "mismatch vs bf16 reference"
    # Loose semantic check vs the full-precision reference (bf16 rounding only).
    assert jnp.allclose(out, ref_f32, atol=5e-2, rtol=5e-2), "mismatch vs f32 reference"

    print("KERNEL_OK")
</pallas_src>

<mosaic_0001>
module attributes {stable_mosaic.version = 11 : i64} {
  func.func @_residual_mlp_kernel(%arg0: i32, %arg1: i32, %arg2: memref<8x128xf32, #tpu.memory_space<vmem>>, %arg3: memref<3x128x384xbf16, #tpu.memory_space<vmem>>, %arg4: memref<3x1x384xf32, #tpu.memory_space<vmem>>, %arg5: memref<3x128x128xbf16, #tpu.memory_space<vmem>>, %arg6: memref<3x128x384xbf16, #tpu.memory_space<vmem>>, %arg7: memref<3x1x384xf32, #tpu.memory_space<vmem>>, %arg8: memref<3x128x128xbf16, #tpu.memory_space<vmem>>, %arg9: memref<8x128xf32, #tpu.memory_space<vmem>>) attributes {dimension_semantics = [#tpu.dimension_semantics<parallel>, #tpu.dimension_semantics<arbitrary>], iteration_bounds = array<i64: 1, 1>, scalar_prefetch = 0 : i64, scratch_operands = 0 : i64, tpu.core_type = #tpu.core_type<tc>, window_params = [{transform_indices = @transform_0, window_bounds = array<i64: 8, 128>}, {transform_indices = @transform_1, window_bounds = array<i64: 3, 128, 384>}, {transform_indices = @transform_2, window_bounds = array<i64: 3, 1, 384>}, {transform_indices = @transform_3, window_bounds = array<i64: 3, 128, 128>}, {transform_indices = @transform_4, window_bounds = array<i64: 3, 128, 384>}, {transform_indices = @transform_5, window_bounds = array<i64: 3, 1, 384>}, {transform_indices = @transform_6, window_bounds = array<i64: 3, 128, 128>}, {transform_indices = @transform_7, window_bounds = array<i64: 8, 128>}]} {
    %c0 = arith.constant 0 : index
    %c0_0 = arith.constant 0 : index
    %0 = vector.load %arg2[%c0, %c0_0] : memref<8x128xf32, #tpu.memory_space<vmem>>, vector<8x128xf32>
    %1 = arith.truncf %0 : vector<8x128xf32> to vector<8x128xbf16>
    %c0_1 = arith.constant 0 : index
    %c0_2 = arith.constant 0 : index
    %c0_3 = arith.constant 0 : index
    %2 = vector.load %arg3[%c0_1, %c0_2, %c0_3] : memref<3x128x384xbf16, #tpu.memory_space<vmem>>, vector<1x128x384xbf16>
    %3 = vector.shape_cast %2 : vector<1x128x384xbf16> to vector<128x384xbf16>
    %cst = arith.constant dense<0.000000e+00> : vector<8x384xf32>
    %4 = tpu.matmul %1, %3, %cst {dimension_numbers = #tpu.dot_dimension_numbers<[1], [0], [0], [1], [0, 0, 1, 1], [], []>} : vector<8x128xbf16>, vector<128x384xbf16>, vector<8x384xf32> -> vector<8x384xf32>
    %c0_4 = arith.constant 0 : index
    %c0_5 = arith.constant 0 : index
    %c0_6 = arith.constant 0 : index
    %5 = vector.load %arg4[%c0_4, %c0_5, %c0_6] : memref<3x1x384xf32, #tpu.memory_space<vmem>>, vector<1x1x384xf32>
    %6 = vector.shape_cast %5 : vector<1x1x384xf32> to vector<1x384xf32>
    %7 = vector.broadcast %6 : vector<1x384xf32> to vector<8x384xf32>
    %8 = arith.addf %4, %7 : vector<8x384xf32>
    %9 = vector.extract_strided_slice %8 {offsets = [0, 0], sizes = [8, 128], strides = [1, 1]} : vector<8x384xf32> to vector<8x128xf32>
    %10 = vector.extract_strided_slice %8 {offsets = [0, 128], sizes = [8, 128], strides = [1, 1]} : vector<8x384xf32> to vector<8x128xf32>
    %cst_7 = arith.constant 5.000000e-01 : f32
    %11 = vector.broadcast %cst_7 : f32 to vector<8x128xf32>
    %12 = arith.mulf %11, %10 : vector<8x128xf32>
    %13 = math.tanh %12 : vector<8x128xf32>
    %cst_8 = arith.constant 5.000000e-01 : f32
    %14 = vector.broadcast %cst_8 : f32 to vector<8x128xf32>
    %15 = arith.mulf %14, %13 : vector<8x128xf32>
    %cst_9 = arith.constant 5.000000e-01 : f32
    %16 = vector.broadcast %cst_9 : f32 to vector<8x128xf32>
    %17 = arith.addf %15, %16 : vector<8x128xf32>
    %18 = vector.extract_strided_slice %8 {offsets = [0, 256], sizes = [8, 128], strides = [1, 1]} : vector<8x384xf32> to vector<8x128xf32>
    %19 = arith.truncf %18 : vector<8x128xf32> to vector<8x128xbf16>
    %c0_10 = arith.constant 0 : index
    %c0_11 = arith.constant 0 : index
    %c0_12 = arith.constant 0 : index
    %20 = vector.load %arg5[%c0_10, %c0_11, %c0_12] : memref<3x128x128xbf16, #tpu.memory_space<vmem>>, vector<1x128x128xbf16>
    %21 = vector.shape_cast %20 : vector<1x128x128xbf16> to vector<128x128xbf16>
    %cst_13 = arith.constant dense<0.000000e+00> : vector<8x128xf32>
    %22 = tpu.matmul %19, %21, %cst_13 {dimension_numbers = #tpu.dot_dimension_numbers<[1], [0], [0], [1], [0, 0, 1, 1], [], []>} : vector<8x128xbf16>, vector<128x128xbf16>, vector<8x128xf32> -> vector<8x128xf32>
    %23 = arith.mulf %22, %17 : vector<8x128xf32>
    %24 = arith.addf %9, %23 : vector<8x128xf32>
    %25 = math.tanh %24 : vector<8x128xf32>
    %26 = arith.truncf %25 : vector<8x128xf32> to vector<8x128xbf16>
    %c0_14 = arith.constant 0 : index
    %c0_15 = arith.constant 0 : index
    %c0_16 = arith.constant 0 : index
    %27 = vector.load %arg6[%c0_14, %c0_15, %c0_16] : memref<3x128x384xbf16, #tpu.memory_space<vmem>>, vector<1x128x384xbf16>
    %28 = vector.shape_cast %27 : vector<1x128x384xbf16> to vector<128x384xbf16>
    %cst_17 = arith.constant dense<0.000000e+00> : vector<8x384xf32>
    %29 = tpu.matmul %26, %28, %cst_17 {dimension_numbers = #tpu.dot_dimension_numbers<[1], [0], [0], [1], [0, 0, 1, 1], [], []>} : vector<8x128xbf16>, vector<128x384xbf16>, vector<8x384xf32> -> vector<8x384xf32>
    %c0_18 = arith.constant 0 : index
    %c0_19 = arith.constant 0 : index
    %c0_20 = arith.constant 0 : index
    %30 = vector.load %arg7[%c0_18, %c0_19, %c0_20] : memref<3x1x384xf32, #tpu.memory_space<vmem>>, vector<1x1x384xf32>
    %31 = vector.shape_cast %30 : vector<1x1x384xf32> to vector<1x384xf32>
    %32 = vector.broadcast %31 : vector<1x384xf32> to vector<8x384xf32>
    %33 = arith.addf %29, %32 : vector<8x384xf32>
    %34 = vector.extract_strided_slice %33 {offsets = [0, 0], sizes = [8, 128], strides = [1, 1]} : vector<8x384xf32> to vector<8x128xf32>
    %35 = vector.extract_strided_slice %33 {offsets = [0, 128], sizes = [8, 128], strides = [1, 1]} : vector<8x384xf32> to vector<8x128xf32>
    %cst_21 = arith.constant 5.000000e-01 : f32
    %36 = vector.broadcast %cst_21 : f32 to vector<8x128xf32>
    %37 = arith.mulf %36, %35 : vector<8x128xf32>
    %38 = math.tanh %37 : vector<8x128xf32>
    %cst_22 = arith.constant 5.000000e-01 : f32
    %39 = vector.broadcast %cst_22 : f32 to vector<8x128xf32>
    %40 = arith.mulf %39, %38 : vector<8x128xf32>
    %cst_23 = arith.constant 5.000000e-01 : f32
    %41 = vector.broadcast %cst_23 : f32 to vector<8x128xf32>
    %42 = arith.addf %40, %41 : vector<8x128xf32>
    %43 = vector.extract_strided_slice %33 {offsets = [0, 256], sizes = [8, 128], strides = [1, 1]} : vector<8x384xf32> to vector<8x128xf32>
    %44 = arith.truncf %43 : vector<8x128xf32> to vector<8x128xbf16>
    %c0_24 = arith.constant 0 : index
    %c0_25 = arith.constant 0 : index
    %c0_26 = arith.constant 0 : index
    %45 = vector.load %arg8[%c0_24, %c0_25, %c0_26] : memref<3x128x128xbf16, #tpu.memory_space<vmem>>, vector<1x128x128xbf16>
    %46 = vector.shape_cast %45 : vector<1x128x128xbf16> to vector<128x128xbf16>
    %cst_27 = arith.constant dense<0.000000e+00> : vector<8x128xf32>
    %47 = tpu.matmul %44, %46, %cst_27 {dimension_numbers = #tpu.dot_dimension_numbers<[1], [0], [0], [1], [0, 0, 1, 1], [], []>} : vector<8x128xbf16>, vector<128x128xbf16>, vector<8x128xf32> -> vector<8x128xf32>
    %48 = arith.mulf %47, %42 : vector<8x128xf32>
    %49 = arith.addf %34, %48 : vector<8x128xf32>
    %50 = arith.addf %49, %0 : vector<8x128xf32>
    %51 = arith.truncf %50 : vector<8x128xf32> to vector<8x128xbf16>
    %c1 = arith.constant 1 : index
    %c0_28 = arith.constant 0 : index
    %c0_29 = arith.constant 0 : index
    %52 = vector.load %arg3[%c1, %c0_28, %c0_29] : memref<3x128x384xbf16, #tpu.memory_space<vmem>>, vector<1x128x384xbf16>
    %53 = vector.shape_cast %52 : vector<1x128x384xbf16> to vector<128x384xbf16>
    %cst_30 = arith.constant dense<0.000000e+00> : vector<8x384xf32>
    %54 = tpu.matmul %51, %53, %cst_30 {dimension_numbers = #tpu.dot_dimension_numbers<[1], [0], [0], [1], [0, 0, 1, 1], [], []>} : vector<8x128xbf16>, vector<128x384xbf16>, vector<8x384xf32> -> vector<8x384xf32>
    %c1_31 = arith.constant 1 : index
    %c0_32 = arith.constant 0 : index
    %c0_33 = arith.constant 0 : index
    %55 = vector.load %arg4[%c1_31, %c0_32, %c0_33] : memref<3x1x384xf32, #tpu.memory_space<vmem>>, vector<1x1x384xf32>
    %56 = vector.shape_cast %55 : vector<1x1x384xf32> to vector<1x384xf32>
    %57 = vector.broadcast %56 : vector<1x384xf32> to vector<8x384xf32>
    %58 = arith.addf %54, %57 : vector<8x384xf32>
    %59 = vector.extract_strided_slice %58 {offsets = [0, 0], sizes = [8, 128], strides = [1, 1]} : vector<8x384xf32> to vector<8x128xf32>
    %60 = vector.extract_strided_slice %58 {offsets = [0, 128], sizes = [8, 128], strides = [1, 1]} : vector<8x384xf32> to vector<8x128xf32>
    %cst_34 = arith.constant 5.000000e-01 : f32
    %61 = vector.broadcast %cst_34 : f32 to vector<8x128xf32>
    %62 = arith.mulf %61, %60 : vector<8x128xf32>
    %63 = math.tanh %62 : vector<8x128xf32>
    %cst_35 = arith.constant 5.000000e-01 : f32
    %64 = vector.broadcast %cst_35 : f32 to vector<8x128xf32>
    %65 = arith.mulf %64, %63 : vector<8x128xf32>
    %cst_36 = arith.constant 5.000000e-01 : f32
    %66 = vector.broadcast %cst_36 : f32 to vector<8x128xf32>
    %67 = arith.addf %65, %66 : vector<8x128xf32>
    %68 = vector.extract_strided_slice %58 {offsets = [0, 256], sizes = [8, 128], strides = [1, 1]} : vector<8x384xf32> to vector<8x128xf32>
    %69 = arith.truncf %68 : vector<8x128xf32> to vector<8x128xbf16>
    %c1_37 = arith.constant 1 : index
    %c0_38 = arith.constant 0 : index
    %c0_39 = arith.constant 0 : index
    %70 = vector.load %arg5[%c1_37, %c0_38, %c0_39] : memref<3x128x128xbf16, #tpu.memory_space<vmem>>, vector<1x128x128xbf16>
    %71 = vector.shape_cast %70 : vector<1x128x128xbf16> to vector<128x128xbf16>
    %cst_40 = arith.constant dense<0.000000e+00> : vector<8x128xf32>
    %72 = tpu.matmul %69, %71, %cst_40 {dimension_numbers = #tpu.dot_dimension_numbers<[1], [0], [0], [1], [0, 0, 1, 1], [], []>} : vector<8x128xbf16>, vector<128x128xbf16>, vector<8x128xf32> -> vector<8x128xf32>
    %73 = arith.mulf %72, %67 : vector<8x128xf32>
    %74 = arith.addf %59, %73 : vector<8x128xf32>
    %75 = math.tanh %74 : vector<8x128xf32>
    %76 = arith.truncf %75 : vector<8x128xf32> to vector<8x128xbf16>
    %c1_41 = arith.constant 1 : index
    %c0_42 = arith.constant 0 : index
    %c0_43 = arith.constant 0 : index
    %77 = vector.load %arg6[%c1_41, %c0_42, %c0_43] : memref<3x128x384xbf16, #tpu.memory_space<vmem>>, vector<1x128x384xbf16>
    %78 = vector.shape_cast %77 : vector<1x128x384xbf16> to vector<128x384xbf16>
    %cst_44 = arith.constant dense<0.000000e+00> : vector<8x384xf32>
    %79 = tpu.matmul %76, %78, %cst_44 {dimension_numbers = #tpu.dot_dimension_numbers<[1], [0], [0], [1], [0, 0, 1, 1], [], []>} : vector<8x128xbf16>, vector<128x384xbf16>, vector<8x384xf32> -> vector<8x384xf32>
    %c1_45 = arith.constant 1 : index
    %c0_46 = arith.constant 0 : index
    %c0_47 = arith.constant 0 : index
    %80 = vector.load %arg7[%c1_45, %c0_46, %c0_47] : memref<3x1x384xf32, #tpu.memory_space<vmem>>, vector<1x1x384xf32>
    %81 = vector.shape_cast %80 : vector<1x1x384xf32> to vector<1x384xf32>
    %82 = vector.broadcast %81 : vector<1x384xf32> to vector<8x384xf32>
    %83 = arith.addf %79, %82 : vector<8x384xf32>
    %84 = vector.extract_strided_slice %83 {offsets = [0, 0], sizes = [8, 128], strides = [1, 1]} : vector<8x384xf32> to vector<8x128xf32>
    %85 = vector.extract_strided_slice %83 {offsets = [0, 128], sizes = [8, 128], strides = [1, 1]} : vector<8x384xf32> to vector<8x128xf32>
    %cst_48 = arith.constant 5.000000e-01 : f32
    %86 = vector.broadcast %cst_48 : f32 to vector<8x128xf32>
    %87 = arith.mulf %86, %85 : vector<8x128xf32>
    %88 = math.tanh %87 : vector<8x128xf32>
    %cst_49 = arith.constant 5.000000e-01 : f32
    %89 = vector.broadcast %cst_49 : f32 to vector<8x128xf32>
    %90 = arith.mulf %89, %88 : vector<8x128xf32>
    %cst_50 = arith.constant 5.000000e-01 : f32
    %91 = vector.broadcast %cst_50 : f32 to vector<8x128xf32>
    %92 = arith.addf %90, %91 : vector<8x128xf32>
    %93 = vector.extract_strided_slice %83 {offsets = [0, 256], sizes = [8, 128], strides = [1, 1]} : vector<8x384xf32> to vector<8x128xf32>
    %94 = arith.truncf %93 : vector<8x128xf32> to vector<8x128xbf16>
    %c1_51 = arith.constant 1 : index
    %c0_52 = arith.constant 0 : index
    %c0_53 = arith.constant 0 : index
    %95 = vector.load %arg8[%c1_51, %c0_52, %c0_53] : memref<3x128x128xbf16, #tpu.memory_space<vmem>>, vector<1x128x128xbf16>
    %96 = vector.shape_cast %95 : vector<1x128x128xbf16> to vector<128x128xbf16>
    %cst_54 = arith.constant dense<0.000000e+00> : vector<8x128xf32>
    %97 = tpu.matmul %94, %96, %cst_54 {dimension_numbers = #tpu.dot_dimension_numbers<[1], [0], [0], [1], [0, 0, 1, 1], [], []>} : vector<8x128xbf16>, vector<128x128xbf16>, vector<8x128xf32> -> vector<8x128xf32>
    %98 = arith.mulf %97, %92 : vector<8x128xf32>
    %99 = arith.addf %84, %98 : vector<8x128xf32>
    %100 = arith.addf %99, %50 : vector<8x128xf32>
    %101 = arith.truncf %100 : vector<8x128xf32> to vector<8x128xbf16>
    %c2 = arith.constant 2 : index
    %c0_55 = arith.constant 0 : index
    %c0_56 = arith.constant 0 : index
    %102 = vector.load %arg3[%c2, %c0_55, %c0_56] : memref<3x128x384xbf16, #tpu.memory_space<vmem>>, vector<1x128x384xbf16>
    %103 = vector.shape_cast %102 : vector<1x128x384xbf16> to vector<128x384xbf16>
    %cst_57 = arith.constant dense<0.000000e+00> : vector<8x384xf32>
    %104 = tpu.matmul %101, %103, %cst_57 {dimension_numbers = #tpu.dot_dimension_numbers<[1], [0], [0], [1], [0, 0, 1, 1], [], []>} : vector<8x128xbf16>, vector<128x384xbf16>, vector<8x384xf32> -> vector<8x384xf32>
    %c2_58 = arith.constant 2 : index
    %c0_59 = arith.constant 0 : index
    %c0_60 = arith.constant 0 : index
    %105 = vector.load %arg4[%c2_58, %c0_59, %c0_60] : memref<3x1x384xf32, #tpu.memory_space<vmem>>, vector<1x1x384xf32>
    %106 = vector.shape_cast %105 : vector<1x1x384xf32> to vector<1x384xf32>
    %107 = vector.broadcast %106 : vector<1x384xf32> to vector<8x384xf32>
    %108 = arith.addf %104, %107 : vector<8x384xf32>
    %109 = vector.extract_strided_slice %108 {offsets = [0, 0], sizes = [8, 128], strides = [1, 1]} : vector<8x384xf32> to vector<8x128xf32>
    %110 = vector.extract_strided_slice %108 {offsets = [0, 128], sizes = [8, 128], strides = [1, 1]} : vector<8x384xf32> to vector<8x128xf32>
    %cst_61 = arith.constant 5.000000e-01 : f32
    %111 = vector.broadcast %cst_61 : f32 to vector<8x128xf32>
    %112 = arith.mulf %111, %110 : vector<8x128xf32>
    %113 = math.tanh %112 : vector<8x128xf32>
    %cst_62 = arith.constant 5.000000e-01 : f32
    %114 = vector.broadcast %cst_62 : f32 to vector<8x128xf32>
    %115 = arith.mulf %114, %113 : vector<8x128xf32>
    %cst_63 = arith.constant 5.000000e-01 : f32
    %116 = vector.broadcast %cst_63 : f32 to vector<8x128xf32>
    %117 = arith.addf %115, %116 : vector<8x128xf32>
    %118 = vector.extract_strided_slice %108 {offsets = [0, 256], sizes = [8, 128], strides = [1, 1]} : vector<8x384xf32> to vector<8x128xf32>
    %119 = arith.truncf %118 : vector<8x128xf32> to vector<8x128xbf16>
    %c2_64 = arith.constant 2 : index
    %c0_65 = arith.constant 0 : index
    %c0_66 = arith.constant 0 : index
    %120 = vector.load %arg5[%c2_64, %c0_65, %c0_66] : memref<3x128x128xbf16, #tpu.memory_space<vmem>>, vector<1x128x128xbf16>
    %121 = vector.shape_cast %120 : vector<1x128x128xbf16> to vector<128x128xbf16>
    %cst_67 = arith.constant dense<0.000000e+00> : vector<8x128xf32>
    %122 = tpu.matmul %119, %121, %cst_67 {dimension_numbers = #tpu.dot_dimension_numbers<[1], [0], [0], [1], [0, 0, 1, 1], [], []>} : vector<8x128xbf16>, vector<128x128xbf16>, vector<8x128xf32> -> vector<8x128xf32>
    %123 = arith.mulf %122, %117 : vector<8x128xf32>
    %124 = arith.addf %109, %123 : vector<8x128xf32>
    %125 = math.tanh %124 : vector<8x128xf32>
    %126 = arith.truncf %125 : vector<8x128xf32> to vector<8x128xbf16>
    %c2_68 = arith.constant 2 : index
    %c0_69 = arith.constant 0 : index
    %c0_70 = arith.constant 0 : index
    %127 = vector.load %arg6[%c2_68, %c0_69, %c0_70] : memref<3x128x384xbf16, #tpu.memory_space<vmem>>, vector<1x128x384xbf16>
    %128 = vector.shape_cast %127 : vector<1x128x384xbf16> to vector<128x384xbf16>
    %cst_71 = arith.constant dense<0.000000e+00> : vector<8x384xf32>
    %129 = tpu.matmul %126, %128, %cst_71 {dimension_numbers = #tpu.dot_dimension_numbers<[1], [0], [0], [1], [0, 0, 1, 1], [], []>} : vector<8x128xbf16>, vector<128x384xbf16>, vector<8x384xf32> -> vector<8x384xf32>
    %c2_72 = arith.constant 2 : index
    %c0_73 = arith.constant 0 : index
    %c0_74 = arith.constant 0 : index
    %130 = vector.load %arg7[%c2_72, %c0_73, %c0_74] : memref<3x1x384xf32, #tpu.memory_space<vmem>>, vector<1x1x384xf32>
    %131 = vector.shape_cast %130 : vector<1x1x384xf32> to vector<1x384xf32>
    %132 = vector.broadcast %131 : vector<1x384xf32> to vector<8x384xf32>
    %133 = arith.addf %129, %132 : vector<8x384xf32>
    %134 = vector.extract_strided_slice %133 {offsets = [0, 0], sizes = [8, 128], strides = [1, 1]} : vector<8x384xf32> to vector<8x128xf32>
    %135 = vector.extract_strided_slice %133 {offsets = [0, 128], sizes = [8, 128], strides = [1, 1]} : vector<8x384xf32> to vector<8x128xf32>
    %cst_75 = arith.constant 5.000000e-01 : f32
    %136 = vector.broadcast %cst_75 : f32 to vector<8x128xf32>
    %137 = arith.mulf %136, %135 : vector<8x128xf32>
    %138 = math.tanh %137 : vector<8x128xf32>
    %cst_76 = arith.constant 5.000000e-01 : f32
    %139 = vector.broadcast %cst_76 : f32 to vector<8x128xf32>
    %140 = arith.mulf %139, %138 : vector<8x128xf32>
    %cst_77 = arith.constant 5.000000e-01 : f32
    %141 = vector.broadcast %cst_77 : f32 to vector<8x128xf32>
    %142 = arith.addf %140, %141 : vector<8x128xf32>
    %143 = vector.extract_strided_slice %133 {offsets = [0, 256], sizes = [8, 128], strides = [1, 1]} : vector<8x384xf32> to vector<8x128xf32>
    %144 = arith.truncf %143 : vector<8x128xf32> to vector<8x128xbf16>
    %c2_78 = arith.constant 2 : index
    %c0_79 = arith.constant 0 : index
    %c0_80 = arith.constant 0 : index
    %145 = vector.load %arg8[%c2_78, %c0_79, %c0_80] : memref<3x128x128xbf16, #tpu.memory_space<vmem>>, vector<1x128x128xbf16>
    %146 = vector.shape_cast %145 : vector<1x128x128xbf16> to vector<128x128xbf16>
    %cst_81 = arith.constant dense<0.000000e+00> : vector<8x128xf32>
    %147 = tpu.matmul %144, %146, %cst_81 {dimension_numbers = #tpu.dot_dimension_numbers<[1], [0], [0], [1], [0, 0, 1, 1], [], []>} : vector<8x128xbf16>, vector<128x128xbf16>, vector<8x128xf32> -> vector<8x128xf32>
    %148 = arith.mulf %147, %142 : vector<8x128xf32>
    %149 = arith.addf %134, %148 : vector<8x128xf32>
    %150 = arith.addf %149, %100 : vector<8x128xf32>
    %c0_82 = arith.constant 0 : index
    %c0_83 = arith.constant 0 : index
    %151 = vector.load %arg9[%c0_82, %c0_83] : memref<8x128xf32, #tpu.memory_space<vmem>>, vector<8x128xf32>
    tpu.vector_store %arg9[%c0_82, %c0_83], %150 {strides = array<i32>} : memref<8x128xf32, #tpu.memory_space<vmem>>, vector<8x128xf32>,
    return
  }
  func.func @transform_0(%arg0: i32, %arg1: i32) -> (i32, i32) {
    %c0_i32 = arith.constant 0 : i32
    %c0_i32_0 = arith.constant 0 : i32
    return %arg0, %c0_i32 : i32, i32
  }
  func.func @transform_1(%arg0: i32, %arg1: i32) -> (i32, i32, i32) {
    %c0_i32 = arith.constant 0 : i32
    %c0_i32_0 = arith.constant 0 : i32
    %c0_i32_1 = arith.constant 0 : i32
    return %arg1, %c0_i32, %c0_i32_0 : i32, i32, i32
  }
  func.func @transform_2(%arg0: i32, %arg1: i32) -> (i32, i32, i32) {
    %c0_i32 = arith.constant 0 : i32
    %c0_i32_0 = arith.constant 0 : i32
    %c0_i32_1 = arith.constant 0 : i32
    return %arg1, %c0_i32, %c0_i32_0 : i32, i32, i32
  }
  func.func @transform_3(%arg0: i32, %arg1: i32) -> (i32, i32, i32) {
    %c0_i32 = arith.constant 0 : i32
    %c0_i32_0 = arith.constant 0 : i32
    %c0_i32_1 = arith.constant 0 : i32
    return %arg1, %c0_i32, %c0_i32_0 : i32, i32, i32
  }
  func.func @transform_4(%arg0: i32, %arg1: i32) -> (i32, i32, i32) {
    %c0_i32 = arith.constant 0 : i32
    %c0_i32_0 = arith.constant 0 : i32
    %c0_i32_1 = arith.constant 0 : i32
    return %arg1, %c0_i32, %c0_i32_0 : i32, i32, i32
  }
  func.func @transform_5(%arg0: i32, %arg1: i32) -> (i32, i32, i32) {
    %c0_i32 = arith.constant 0 : i32
    %c0_i32_0 = arith.constant 0 : i32
    %c0_i32_1 = arith.constant 0 : i32
    return %arg1, %c0_i32, %c0_i32_0 : i32, i32, i32
  }
  func.func @transform_6(%arg0: i32, %arg1: i32) -> (i32, i32, i32) {
    %c0_i32 = arith.constant 0 : i32
    %c0_i32_0 = arith.constant 0 : i32
    %c0_i32_1 = arith.constant 0 : i32
    return %arg1, %c0_i32, %c0_i32_0 : i32, i32, i32
  }
  func.func @transform_7(%arg0: i32, %arg1: i32) -> (i32, i32) {
    %c0_i32 = arith.constant 0 : i32
    %c0_i32_0 = arith.constant 0 : i32
    return %arg0, %c0_i32 : i32, i32
  }
}

</mosaic_0001>

<llo_original>
// kernel: tpu_custom_call.1
$region0: #{tpu_custom_call.1}
  #allocation0 [shape = 'u32[]', space=smem, size = 0x4, offset = 0x4, fixed_abs, tag = 'smem constant byte address 0x4 - core index']
  #allocation1 [shape = 'u32[72,128]{1,0:T(1,128)}', space=vmem, size = 0x9000, scoped, tag = 'internal scratch']
  %s0 = inlined_call_operand.hbm [shape: f32[8,128], index: 0, kind: input, shape index: {}]
  %s1 = inlined_call_operand.hbm [shape: bf16[3,128,384], index: 1, kind: input, shape index: {}]
  %s2 = inlined_call_operand.hbm [shape: f32[3,1,384], index: 2, kind: input, shape index: {}]
  %s3 = inlined_call_operand.hbm [shape: bf16[3,128,128], index: 3, kind: input, shape index: {}]
  %s4 = inlined_call_operand.hbm [shape: bf16[3,128,384], index: 4, kind: input, shape index: {}]
  %s5 = inlined_call_operand.hbm [shape: f32[3,1,384], index: 5, kind: input, shape index: {}]
  %s6 = inlined_call_operand.hbm [shape: bf16[3,128,128], index: 6, kind: input, shape index: {}]
  %s7 = inlined_call_operand.hbm [shape: f32[8,128], index: 7, kind: output, shape index: {}]
  %s8 = sld [smem:[#allocation0]]
  $region66: #{tpu_custom_call.1} parent=0
    _
  %s10 = ssub.s32 1, %s8
  %s11 = scalar_select 0, %s10, %s8
  $region1: #{tpu_custom_call.1} parent=0
    #allocation2 [shape = 'u8[4096]{0}', space=vmem, size = 0x1000, scoped, tag = 'input window, operand 0, single buffered']
    #allocation3 [shape = 's32[1]{0}', space=sflag, size = 0x4, scoped, tag = 'scoped memory for tpu_custom_call.1']
    #allocation4 [shape = 's32[1]{0}', space=sflag, size = 0x4, scoped, tag = 'scoped memory for tpu_custom_call.1']
    #allocation5 [shape = 'u8[294912]{0}', space=vmem, size = 0x48000, scoped, tag = 'input window, operand 1, single buffered']
    #allocation6 [shape = 's32[1]{0}', space=sflag, size = 0x4, scoped, tag = 'scoped memory for tpu_custom_call.1']
    #allocation7 [shape = 'u8[4608]{0}', space=vmem, size = 0x1400, scoped, tag = 'input window, operand 2, single buffered']
    #allocation8 [shape = 'u8[98304]{0}', space=vmem, size = 0x18000, scoped, tag = 'input window, operand 3, single buffered']
    #allocation9 [shape = 's32[1]{0}', space=sflag, size = 0x4, scoped, tag = 'scoped memory for tpu_custom_call.1']
    #allocation10 [shape = 'u8[294912]{0}', space=vmem, size = 0x48000, scoped, tag = 'input window, operand 4, single buffered']
    #allocation11 [shape = 'u8[4608]{0}', space=vmem, size = 0x1400, scoped, tag = 'input window, operand 5, single buffered']
    #allocation12 [shape = 's32[1]{0}', space=sflag, size = 0x4, scoped, tag = 'scoped memory for tpu_custom_call.1']
    #allocation13 [shape = 'u8[98304]{0}', space=vmem, size = 0x18000, scoped, tag = 'input window, operand 6, single buffered']
    #allocation14 [shape = 'u8[4096]{0}', space=vmem, size = 0x1000, scoped, tag = 'output window, operand 0, single buffered']
    %12 = vsyncpa [#allocation3], 0
    %13 = vsyncpa [#allocation6], 0
    %14 = vsyncpa [#allocation9], 0
    %15 = vsyncpa [#allocation12], 0
    %16 = vsyncpa [#allocation4], 0
    // Predicated region
    $region2: #{tpu_custom_call.1} parent=1 // pred_check
      _
    $region3: #{tpu_custom_call.1} parent=1 // pred_check_branch
      %18 = sbr.rel (0) target = $region5
    $region4: #{tpu_custom_call.1} parent=1 // pred_region
      %20 = vsyncadd [#allocation3], 0
      %s22 = sshll.u32 %s0, 4
      %s23 = int_to_ptr.hbm [resolvable:$true] %s22
      %s24 = sshll.u32 [#allocation2], 4
      %s25 = int_to_ptr.vmem [resolvable:$true] %s24
      %27 = dma.hbm_to_vmem [thread:$0]  %s23, 128, %s25, [#allocation3]
    $region5: #{tpu_custom_call.1} parent=1 // pred_fallthru
      _
    // Predicated region
    $region6: #{tpu_custom_call.1} parent=1 // pred_check
      _
    $region7: #{tpu_custom_call.1} parent=1 // pred_check_branch
      %29 = sbr.rel (0) target = $region9
    $region8: #{tpu_custom_call.1} parent=1 // pred_region
      %31 = vsyncadd [#allocation6], 0
      %s32 = sshll.u32 %s1, 4
      %s33 = int_to_ptr.hbm [resolvable:$true] %s32
      %s34 = sshll.u32 [#allocation5], 4
      %s35 = int_to_ptr.vmem [resolvable:$true] %s34
      %40 = dma.hbm_to_vmem [thread:$0]  %s33, 9216, %s35, [#allocation6], 192, 192, 12
    $region9: #{tpu_custom_call.1} parent=1 // pred_fallthru
      _
    // Predicated region
    $region10: #{tpu_custom_call.1} parent=1 // pred_check
      _
    $region11: #{tpu_custom_call.1} parent=1 // pred_check_branch
      %42 = sbr.rel (0) target = $region13
    $region12: #{tpu_custom_call.1} parent=1 // pred_region
      %44 = vsyncadd [#allocation6], 0
      %s45 = sshll.u32 %s2, 4
      %s46 = int_to_ptr.hbm [resolvable:$true] %s45
      %s47 = sshll.u32 [#allocation7], 4
      %s48 = int_to_ptr.vmem [resolvable:$true] %s47
      %53 = dma.hbm_to_vmem [thread:$0]  %s46, 144, %s48, [#allocation6], 48, 48, 3
    $region13: #{tpu_custom_call.1} parent=1 // pred_fallthru
      _
    // Predicated region
    $region14: #{tpu_custom_call.1} parent=1 // pred_check
      _
    $region15: #{tpu_custom_call.1} parent=1 // pred_check_branch
      %55 = sbr.rel (0) target = $region17
    $region16: #{tpu_custom_call.1} parent=1 // pred_region
      %57 = vsyncadd [#allocation9], 0
      %s58 = sshll.u32 %s3, 4
      %s59 = int_to_ptr.hbm [resolvable:$true] %s58
      %s60 = sshll.u32 [#allocation8], 4
      %s61 = int_to_ptr.vmem [resolvable:$true] %s60
      %66 = dma.hbm_to_vmem [thread:$0]  %s59, 3072, %s61, [#allocation9], 64, 64, 4
    $region17: #{tpu_custom_call.1} parent=1 // pred_fallthru
      _
    // Predicated region
    $region18: #{tpu_custom_call.1} parent=1 // pred_check
      _
    $region19: #{tpu_custom_call.1} parent=1 // pred_check_branch
      %68 = sbr.rel (0) target = $region21
    $region20: #{tpu_custom_call.1} parent=1 // pred_region
      %70 = vsyncadd [#allocation9], 0
      %s71 = sshll.u32 %s4, 4
      %s72 = int_to_ptr.hbm [resolvable:$true] %s71
      %s73 = sshll.u32 [#allocation10], 4
      %s74 = int_to_ptr.vmem [resolvable:$true] %s73
      %79 = dma.hbm_to_vmem [thread:$0]  %s72, 9216, %s74, [#allocation9], 192, 192, 12
    $region21: #{tpu_custom_call.1} parent=1 // pred_fallthru
      _
    // Predicated region
    $region22: #{tpu_custom_call.1} parent=1 // pred_check
      _
    $region23: #{tpu_custom_call.1} parent=1 // pred_check_branch
      %81 = sbr.rel (0) target = $region25
    $region24: #{tpu_custom_call.1} parent=1 // pred_region
      %83 = vsyncadd [#allocation12], 0
      %s84 = sshll.u32 %s5, 4
      %s85 = int_to_ptr.hbm [resolvable:$true] %s84
      %s86 = sshll.u32 [#allocation11], 4
      %s87 = int_to_ptr.vmem [resolvable:$true] %s86
      %92 = dma.hbm_to_vmem [thread:$0]  %s85, 144, %s87, [#allocation12], 48, 48, 3
    $region25: #{tpu_custom_call.1} parent=1 // pred_fallthru
      _
    // Predicated region
    $region26: #{tpu_custom_call.1} parent=1 // pred_check
      _
    $region27: #{tpu_custom_call.1} parent=1 // pred_check_branch
      %94 = sbr.rel (0) target = $region29
    $region28: #{tpu_custom_call.1} parent=1 // pred_region
      %96 = vsyncadd [#allocation12], 0
      %s97 = sshll.u32 %s6, 4
      %s98 = int_to_ptr.hbm [resolvable:$true] %s97
      %s99 = sshll.u32 [#allocation13], 4
      %s100 = int_to_ptr.vmem [resolvable:$true] %s99
      %105 = dma.hbm_to_vmem [thread:$0]  %s98, 3072, %s100, [#allocation12], 64, 64, 4
    $region29: #{tpu_custom_call.1} parent=1 // pred_fallthru
      _
    // Predicated region
    $region30: #{tpu_custom_call.1} parent=1 // pred_check
      _
    $region31: #{tpu_custom_call.1} parent=1 // pred_check_branch
      %107 = sbr.rel (0) target = $region33
    $region32: #{tpu_custom_call.1} parent=1 // pred_region
      %109 = dma.done [#allocation3], 128
    $region33: #{tpu_custom_call.1} parent=1 // pred_fallthru
      _
    // Predicated region
    $region34: #{tpu_custom_call.1} parent=1 // pred_check
      _
    $region35: #{tpu_custom_call.1} parent=1 // pred_check_branch
      %111 = sbr.rel (0) target = $region37
    $region36: #{tpu_custom_call.1} parent=1 // pred_region
      %113 = dma.done [#allocation6], 9216
    $region37: #{tpu_custom_call.1} parent=1 // pred_fallthru
      _
    // Predicated region
    $region38: #{tpu_custom_call.1} parent=1 // pred_check
      _
    $region39: #{tpu_custom_call.1} parent=1 // pred_check_branch
      %115 = sbr.rel (0) target = $region41
    $region40: #{tpu_custom_call.1} parent=1 // pred_region
      %117 = dma.done [#allocation6], 144
    $region41: #{tpu_custom_call.1} parent=1 // pred_fallthru
      _
    // Predicated region
    $region42: #{tpu_custom_call.1} parent=1 // pred_check
      _
    $region43: #{tpu_custom_call.1} parent=1 // pred_check_branch
      %119 = sbr.rel (0) target = $region45
    $region44: #{tpu_custom_call.1} parent=1 // pred_region
      %121 = dma.done [#allocation9], 3072
    $region45: #{tpu_custom_call.1} parent=1 // pred_fallthru
      _
    // Predicated region
    $region46: #{tpu_custom_call.1} parent=1 // pred_check
      _
    $region47: #{tpu_custom_call.1} parent=1 // pred_check_branch
      %123 = sbr.rel (0) target = $region49
    $region48: #{tpu_custom_call.1} parent=1 // pred_region
      %125 = dma.done [#allocation9], 9216
    $region49: #{tpu_custom_call.1} parent=1 // pred_fallthru
      _
    // Predicated region
    $region50: #{tpu_custom_call.1} parent=1 // pred_check
      _
    $region51: #{tpu_custom_call.1} parent=1 // pred_check_branch
      %127 = sbr.rel (0) target = $region53
    $region52: #{tpu_custom_call.1} parent=1 // pred_region
      %129 = dma.done [#allocation12], 144
    $region53: #{tpu_custom_call.1} parent=1 // pred_fallthru
      _
    // Predicated region
    $region54: #{tpu_custom_call.1} parent=1 // pred_check
      _
    $region55: #{tpu_custom_call.1} parent=1 // pred_check_branch
      %131 = sbr.rel (0) target = $region57
    $region56: #{tpu_custom_call.1} parent=1 // pred_region
      %133 = dma.done [#allocation12], 3072
    $region57: #{tpu_custom_call.1} parent=1 // pred_fallthru
      _
    %v134 = vld [vmem:[#allocation2] sm:$0xff]
    %v135 = vpack.c.bf16 %v134, %v134
    %v136 = vld [vmem:[#allocation5] sm:$0xff]
    %v137 = vld [vmem:[#allocation5 + $0x8] sm:$0xf]
    %v138 = vld [vmem:[#allocation5 + $0xc] sm:$0xff]
    %v139 = vld [vmem:[#allocation5 + $0x14] sm:$0xf]
    %v140 = vld [vmem:[#allocation5 + $0x18] sm:$0xff]
    %v141 = vld [vmem:[#allocation5 + $0x20] sm:$0xf]
    %v142 = vld [vmem:[#allocation5 + $0x24] sm:$0xff]
    %v143 = vld [vmem:[#allocation5 + $0x2c] sm:$0xf]
    %v144 = vld [vmem:[#allocation5 + $0x30] sm:$0xff]
    %v145 = vld [vmem:[#allocation5 + $0x38] sm:$0xf]
    %v146 = vld [vmem:[#allocation5 + $0x3c] sm:$0xff]
    %v147 = vld [vmem:[#allocation5 + $0x44] sm:$0xf]
    %v148 = vld [vmem:[#allocation5 + $0x48] sm:$0xff]
    %v149 = vld [vmem:[#allocation5 + $0x50] sm:$0xf]
    %v150 = vld [vmem:[#allocation5 + $0x54] sm:$0xff]
    %v151 = vld [vmem:[#allocation5 + $0x5c] sm:$0xf]
    %v152 = vld [vmem:[#allocation5 + $0x60] sm:$0xff]
    %v153 = vld [vmem:[#allocation5 + $0x68] sm:$0xf]
    %v154 = vld [vmem:[#allocation5 + $0x6c] sm:$0xff]
    %v155 = vld [vmem:[#allocation5 + $0x74] sm:$0xf]
    %v156 = vld [vmem:[#allocation5 + $0x78] sm:$0xff]
    %v157 = vld [vmem:[#allocation5 + $0x80] sm:$0xf]
    %v158 = vld [vmem:[#allocation5 + $0x84] sm:$0xff]
    %v159 = vld [vmem:[#allocation5 + $0x8c] sm:$0xf]
    %v160 = vld [vmem:[#allocation5 + $0x90] sm:$0xff]
    %v161 = vld [vmem:[#allocation5 + $0x98] sm:$0xf]
    %v162 = vld [vmem:[#allocation5 + $0x9c] sm:$0xff]
    %v163 = vld [vmem:[#allocation5 + $0xa4] sm:$0xf]
    %v164 = vld [vmem:[#allocation5 + $0xa8] sm:$0xff]
    %v165 = vld [vmem:[#allocation5 + $0xb0] sm:$0xf]
    %v166 = vld [vmem:[#allocation5 + $0xb4] sm:$0xff]
    %v167 = vld [vmem:[#allocation5 + $0xbc] sm:$0xf]
    %v168 = vld [vmem:[#allocation7] sm:$0x7]
    %v170 = vperm.slane %v168, 0
    %v171 = vperm.slane %v168, 1
    %v172 = vperm.slane %v168, 2
    %v208 = vunpack.c.l.b16 %v136
    %v209 = vunpack.c.h.b16 %v136
    %v210 = vunpack.c.l.b16 %v137
    %v211 = vunpack.c.l.b16 %v138
    %v212 = vunpack.c.h.b16 %v138
    %v213 = vunpack.c.l.b16 %v139
    %v214 = vunpack.c.l.b16 %v140
    %v215 = vunpack.c.h.b16 %v140
    %v216 = vunpack.c.l.b16 %v141
    %v217 = vunpack.c.l.b16 %v142
    %v218 = vunpack.c.h.b16 %v142
    %v219 = vunpack.c.l.b16 %v143
    %v220 = vunpack.c.l.b16 %v144
    %v221 = vunpack.c.h.b16 %v144
    %v222 = vunpack.c.l.b16 %v145
    %v223 = vunpack.c.l.b16 %v146
    %v224 = vunpack.c.h.b16 %v146
    %v225 = vunpack.c.l.b16 %v147
    %v226 = vunpack.c.l.b16 %v148
    %v227 = vunpack.c.h.b16 %v148
    %v228 = vunpack.c.l.b16 %v149
    %v229 = vunpack.c.l.b16 %v150
    %v230 = vunpack.c.h.b16 %v150
    %v231 = vunpack.c.l.b16 %v151
    %v232 = vunpack.c.l.b16 %v152
    %v233 = vunpack.c.h.b16 %v152
    %v234 = vunpack.c.l.b16 %v153
    %v235 = vunpack.c.l.b16 %v154
    %v236 = vunpack.c.h.b16 %v154
    %v237 = vunpack.c.l.b16 %v155
    %v238 = vunpack.c.l.b16 %v156
    %v239 = vunpack.c.h.b16 %v156
    %v240 = vunpack.c.l.b16 %v157
    %v241 = vunpack.c.l.b16 %v158
    %v242 = vunpack.c.h.b16 %v158
    %v243 = vunpack.c.l.b16 %v159
    %v244 = vunpack.c.l.b16 %v160
    %v245 = vunpack.c.h.b16 %v160
    %v246 = vunpack.c.l.b16 %v161
    %v247 = vunpack.c.l.b16 %v162
    %v248 = vunpack.c.h.b16 %v162
    %v249 = vunpack.c.l.b16 %v163
    %v250 = vunpack.c.l.b16 %v164
    %v251 = vunpack.c.h.b16 %v164
    %v252 = vunpack.c.l.b16 %v165
    %v253 = vunpack.c.l.b16 %v166
    %v254 = vunpack.c.h.b16 %v166
    %v255 = vunpack.c.l.b16 %v167
    %v256 = vpack.c.b16 %v211, %v208
    %v257 = vpack.c.b16 %v212, %v209
    %v258 = vpack.c.b16 %v213, %v210
    %v259 = vpack.c.b16 %v217, %v214
    %v260 = vpack.c.b16 %v218, %v215
    %v261 = vpack.c.b16 %v219, %v216
    %v262 = vpack.c.b16 %v223, %v220
    %v263 = vpack.c.b16 %v224, %v221
    %v264 = vpack.c.b16 %v225, %v222
    %v265 = vpack.c.b16 %v229, %v226
    %v266 = vpack.c.b16 %v230, %v227
    %v267 = vpack.c.b16 %v231, %v228
    %v268 = vpack.c.b16 %v235, %v232
    %v269 = vpack.c.b16 %v236, %v233
    %v270 = vpack.c.b16 %v237, %v234
    %v271 = vpack.c.b16 %v241, %v238
    %v272 = vpack.c.b16 %v242, %v239
    %v273 = vpack.c.b16 %v243, %v240
    %v274 = vpack.c.b16 %v247, %v244
    %v275 = vpack.c.b16 %v248, %v245
    %v276 = vpack.c.b16 %v249, %v246
    %v277 = vpack.c.b16 %v253, %v250
    %v278 = vpack.c.b16 %v254, %v251
    %v279 = vpack.c.b16 %v255, %v252
    %304 = vmatpush.bf16.msra.mxu0 %v277
    %305 = vmatpush.bf16.msra.mxu0 %v274
    %306 = vmatpush.bf16.msra.mxu0 %v271
    %307 = vmatpush.bf16.msra.mxu0 %v268
    %308 = vmatpush.bf16.msra.mxu0 %v265
    %309 = vmatpush.bf16.msra.mxu0 %v262
    %310 = vmatpush.bf16.msra.mxu0 %v259
    %311 = vmatpush.bf16.msra.mxu0 %v256
    %312 = vmatmul.bf16.gmra.mxu0 %v135
    %v313 = vpop.f32.mrf.mxu0
    %v314 = vadd.f32 %v170, %v313
    %v315 = vpop.f32.mrf.mxu0
    %316 = vdwg.mxu0
    %317 = vmatpush.bf16.msra.mxu0 %v278
    %318 = vmatpush.bf16.msra.mxu0 %v275
    %319 = vmatpush.bf16.msra.mxu0 %v272
    %320 = vmatpush.bf16.msra.mxu0 %v269
    %321 = vmatpush.bf16.msra.mxu0 %v266
    %322 = vmatpush.bf16.msra.mxu0 %v263
    %323 = vmatpush.bf16.msra.mxu0 %v260
    %324 = vmatpush.bf16.msra.mxu0 %v257
    %325 = vmatmul.bf16.gmra.mxu0 %v135
    %v326 = vpop.f32.mrf.mxu0
    %v327 = vadd.f32 %v171, %v326
    %v328 = vpop.f32.mrf.mxu0
    %329 = vdwg.mxu0
    %330 = vmatpush.bf16.msra.mxu0 %v279
    %331 = vmatpush.bf16.msra.mxu0 %v276
    %332 = vmatpush.bf16.msra.mxu0 %v273
    %333 = vmatpush.bf16.msra.mxu0 %v270
    %334 = vmatpush.bf16.msra.mxu0 %v267
    %335 = vmatpush.bf16.msra.mxu0 %v264
    %336 = vmatpush.bf16.msra.mxu0 %v261
    %337 = vmatpush.bf16.msra.mxu0 %v258
    %338 = vmatmul.bf16.gmra.mxu0 %v135
    %v339 = vpop.f32.mrf.mxu0
    %v340 = vadd.f32 %v172, %v339
    %v341 = vpop.f32.mrf.mxu0
    %342 = vdwg.mxu0
    %v343 = vmul.f32 %v327, 0.5
    %v344 = vtanh.pop %v343
    %v345 = vmul.f32 %v344, 0.5
    %v346 = vadd.f32 %v345, 0.5
    %v347 = vpack.c.bf16 %v340, %v340
    %v348 = vld [vmem:[#allocation8] sm:$0xf]
    %v349 = vld [vmem:[#allocation8 + $0x4] sm:$0xf]
    %v350 = vld [vmem:[#allocation8 + $0x8] sm:$0xf]
    %v351 = vld [vmem:[#allocation8 + $0xc] sm:$0xf]
    %v352 = vld [vmem:[#allocation8 + $0x10] sm:$0xf]
    %v353 = vld [vmem:[#allocation8 + $0x14] sm:$0xf]
    %v354 = vld [vmem:[#allocation8 + $0x18] sm:$0xf]
    %v355 = vld [vmem:[#allocation8 + $0x1c] sm:$0xf]
    %v356 = vld [vmem:[#allocation8 + $0x20] sm:$0xf]
    %v357 = vld [vmem:[#allocation8 + $0x24] sm:$0xf]
    %v358 = vld [vmem:[#allocation8 + $0x28] sm:$0xf]
    %v359 = vld [vmem:[#allocation8 + $0x2c] sm:$0xf]
    %v360 = vld [vmem:[#allocation8 + $0x30] sm:$0xf]
    %v361 = vld [vmem:[#allocation8 + $0x34] sm:$0xf]
    %v362 = vld [vmem:[#allocation8 + $0x38] sm:$0xf]
    %v363 = vld [vmem:[#allocation8 + $0x3c] sm:$0xf]
    %v380 = vunpack.c.l.b16 %v348
    %v381 = vunpack.c.l.b16 %v349
    %v382 = vunpack.c.l.b16 %v350
    %v383 = vunpack.c.l.b16 %v351
    %v384 = vunpack.c.l.b16 %v352
    %v385 = vunpack.c.l.b16 %v353
    %v386 = vunpack.c.l.b16 %v354
    %v387 = vunpack.c.l.b16 %v355
    %v388 = vunpack.c.l.b16 %v356
    %v389 = vunpack.c.l.b16 %v357
    %v390 = vunpack.c.l.b16 %v358
    %v391 = vunpack.c.l.b16 %v359
    %v392 = vunpack.c.l.b16 %v360
    %v393 = vunpack.c.l.b16 %v361
    %v394 = vunpack.c.l.b16 %v362
    %v395 = vunpack.c.l.b16 %v363
    %v396 = vpack.c.b16 %v381, %v380
    %v397 = vpack.c.b16 %v383, %v382
    %v398 = vpack.c.b16 %v385, %v384
    %v399 = vpack.c.b16 %v387, %v386
    %v400 = vpack.c.b16 %v389, %v388
    %v401 = vpack.c.b16 %v391, %v390
    %v402 = vpack.c.b16 %v393, %v392
    %v403 = vpack.c.b16 %v395, %v394
    %412 = vmatpush.bf16.msra.mxu0 %v403
    %413 = vmatpush.bf16.msra.mxu0 %v402
    %414 = vmatpush.bf16.msra.mxu0 %v401
    %415 = vmatpush.bf16.msra.mxu0 %v400
    %416 = vmatpush.bf16.msra.mxu0 %v399
    %417 = vmatpush.bf16.msra.mxu0 %v398
    %418 = vmatpush.bf16.msra.mxu0 %v397
    %419 = vmatpush.bf16.msra.mxu0 %v396
    %420 = vmatmul.bf16.gmra.mxu0 %v347
    %v421 = vpop.f32.mrf.mxu0
    %v422 = vadd.f32 0.0, %v421
    %v423 = vpop.f32.mrf.mxu0
    %424 = vdwg.mxu0
    %v425 = vmul.f32 %v422, %v346
    %v426 = vadd.f32 %v314, %v425
    %v427 = vtanh.pop %v426
    %v428 = vpack.c.bf16 %v427, %v427
    %v429 = vld [vmem:[#allocation10] sm:$0xff]
    %v430 = vld [vmem:[#allocation10 + $0x8] sm:$0xf]
    %v431 = vld [vmem:[#allocation10 + $0xc] sm:$0xff]
    %v432 = vld [vmem:[#allocation10 + $0x14] sm:$0xf]
    %v433 = vld [vmem:[#allocation10 + $0x18] sm:$0xff]
    %v434 = vld [vmem:[#allocation10 + $0x20] sm:$0xf]
    %v435 = vld [vmem:[#allocation10 + $0x24] sm:$0xff]
    %v436 = vld [vmem:[#allocation10 + $0x2c] sm:$0xf]
    %v437 = vld [vmem:[#allocation10 + $0x30] sm:$0xff]
    %v438 = vld [vmem:[#allocation10 + $0x38] sm:$0xf]
    %v439 = vld [vmem:[#allocation10 + $0x3c] sm:$0xff]
    %v440 = vld [vmem:[#allocation10 + $0x44] sm:$0xf]
    %v441 = vld [vmem:[#allocation10 + $0x48] sm:$0xff]
    %v442 = vld [vmem:[#allocation10 + $0x50] sm:$0xf]
    %v443 = vld [vmem:[#allocation10 + $0x54] sm:$0xff]
    %v444 = vld [vmem:[#allocation10 + $0x5c] sm:$0xf]
    %v445 = vld [vmem:[#allocation10 + $0x60] sm:$0xff]
    %v446 = vld [vmem:[#allocation10 + $0x68] sm:$0xf]
    %v447 = vld [vmem:[#allocation10 + $0x6c] sm:$0xff]
    %v448 = vld [vmem:[#allocation10 + $0x74] sm:$0xf]
    %v449 = vld [vmem:[#allocation10 + $0x78] sm:$0xff]
    %v450 = vld [vmem:[#allocation10 + $0x80] sm:$0xf]
    %v451 = vld [vmem:[#allocation10 + $0x84] sm:$0xff]
    %v452 = vld [vmem:[#allocation10 + $0x8c] sm:$0xf]
    %v453 = vld [vmem:[#allocation10 + $0x90] sm:$0xff]
    %v454 = vld [vmem:[#allocation10 + $0x98] sm:$0xf]
    %v455 = vld [vmem:[#allocation10 + $0x9c] sm:$0xff]
    %v456 = vld [vmem:[#allocation10 + $0xa4] sm:$0xf]
    %v457 = vld [vmem:[#allocation10 + $0xa8] sm:$0xff]
    %v458 = vld [vmem:[#allocation10 + $0xb0] sm:$0xf]
    %v459 = vld [vmem:[#allocation10 + $0xb4] sm:$0xff]
    %v460 = vld [vmem:[#allocation10 + $0xbc] sm:$0xf]
    %v461 = vld [vmem:[#allocation11] sm:$0x7]
    %v463 = vperm.slane %v461, 0
    %v464 = vperm.slane %v461, 1
    %v465 = vperm.slane %v461, 2
    %v501 = vunpack.c.l.b16 %v429
    %v502 = vunpack.c.h.b16 %v429
    %v503 = vunpack.c.l.b16 %v430
    %v504 = vunpack.c.l.b16 %v431
    %v505 = vunpack.c.h.b16 %v431
    %v506 = vunpack.c.l.b16 %v432
    %v507 = vunpack.c.l.b16 %v433
    %v508 = vunpack.c.h.b16 %v433
    %v509 = vunpack.c.l.b16 %v434
    %v510 = vunpack.c.l.b16 %v435
    %v511 = vunpack.c.h.b16 %v435
    %v512 = vunpack.c.l.b16 %v436
    %v513 = vunpack.c.l.b16 %v437
    %v514 = vunpack.c.h.b16 %v437
    %v515 = vunpack.c.l.b16 %v438
    %v516 = vunpack.c.l.b16 %v439
    %v517 = vunpack.c.h.b16 %v439
    %v518 = vunpack.c.l.b16 %v440
    %v519 = vunpack.c.l.b16 %v441
    %v520 = vunpack.c.h.b16 %v441
    %v521 = vunpack.c.l.b16 %v442
    %v522 = vunpack.c.l.b16 %v443
    %v523 = vunpack.c.h.b16 %v443
    %v524 = vunpack.c.l.b16 %v444
    %v525 = vunpack.c.l.b16 %v445
    %v526 = vunpack.c.h.b16 %v445
    %v527 = vunpack.c.l.b16 %v446
    %v528 = vunpack.c.l.b16 %v447
    %v529 = vunpack.c.h.b16 %v447
    %v530 = vunpack.c.l.b16 %v448
    %v531 = vunpack.c.l.b16 %v449
    %v532 = vunpack.c.h.b16 %v449
    %v533 = vunpack.c.l.b16 %v450
    %v534 = vunpack.c.l.b16 %v451
    %v535 = vunpack.c.h.b16 %v451
    %v536 = vunpack.c.l.b16 %v452
    %v537 = vunpack.c.l.b16 %v453
    %v538 = vunpack.c.h.b16 %v453
    %v539 = vunpack.c.l.b16 %v454
    %v540 = vunpack.c.l.b16 %v455
    %v541 = vunpack.c.h.b16 %v455
    %v542 = vunpack.c.l.b16 %v456
    %v543 = vunpack.c.l.b16 %v457
    %v544 = vunpack.c.h.b16 %v457
    %v545 = vunpack.c.l.b16 %v458
    %v546 = vunpack.c.l.b16 %v459
    %v547 = vunpack.c.h.b16 %v459
    %v548 = vunpack.c.l.b16 %v460
    %v549 = vpack.c.b16 %v504, %v501
    %v550 = vpack.c.b16 %v505, %v502
    %v551 = vpack.c.b16 %v506, %v503
    %v552 = vpack.c.b16 %v510, %v507
    %v553 = vpack.c.b16 %v511, %v508
    %v554 = vpack.c.b16 %v512, %v509
    %v555 = vpack.c.b16 %v516, %v513
    %v556 = vpack.c.b16 %v517, %v514
    %v557 = vpack.c.b16 %v518, %v515
    %v558 = vpack.c.b16 %v522, %v519
    %v559 = vpack.c.b16 %v523, %v520
    %v560 = vpack.c.b16 %v524, %v521
    %v561 = vpack.c.b16 %v528, %v525
    %v562 = vpack.c.b16 %v529, %v526
    %v563 = vpack.c.b16 %v530, %v527
    %v564 = vpack.c.b16 %v534, %v531
    %v565 = vpack.c.b16 %v535, %v532
    %v566 = vpack.c.b16 %v536, %v533
    %v567 = vpack.c.b16 %v540, %v537
    %v568 = vpack.c.b16 %v541, %v538
    %v569 = vpack.c.b16 %v542, %v539
    %v570 = vpack.c.b16 %v546, %v543
    %v571 = vpack.c.b16 %v547, %v544
    %v572 = vpack.c.b16 %v548, %v545
    %597 = vmatpush.bf16.msra.mxu0 %v570
    %598 = vmatpush.bf16.msra.mxu0 %v567
    %599 = vmatpush.bf16.msra.mxu0 %v564
    %600 = vmatpush.bf16.msra.mxu0 %v561
    %601 = vmatpush.bf16.msra.mxu0 %v558
    %602 = vmatpush.bf16.msra.mxu0 %v555
    %603 = vmatpush.bf16.msra.mxu0 %v552
    %604 = vmatpush.bf16.msra.mxu0 %v549
    %605 = vmatmul.bf16.gmra.mxu0 %v428
    %v606 = vpop.f32.mrf.mxu0
    %v607 = vadd.f32 %v463, %v606
    %v608 = vpop.f32.mrf.mxu0
    %609 = vdwg.mxu0
    %610 = vmatpush.bf16.msra.mxu0 %v571
    %611 = vmatpush.bf16.msra.mxu0 %v568
    %612 = vmatpush.bf16.msra.mxu0 %v565
    %613 = vmatpush.bf16.msra.mxu0 %v562
    %614 = vmatpush.bf16.msra.mxu0 %v559
    %615 = vmatpush.bf16.msra.mxu0 %v556
    %616 = vmatpush.bf16.msra.mxu0 %v553
    %617 = vmatpush.bf16.msra.mxu0 %v550
    %618 = vmatmul.bf16.gmra.mxu0 %v428
    %v619 = vpop.f32.mrf.mxu0
    %v620 = vadd.f32 %v464, %v619
    %v621 = vpop.f32.mrf.mxu0
    %622 = vdwg.mxu0
    %623 = vmatpush.bf16.msra.mxu0 %v572
    %624 = vmatpush.bf16.msra.mxu0 %v569
    %625 = vmatpush.bf16.msra.mxu0 %v566
    %626 = vmatpush.bf16.msra.mxu0 %v563
    %627 = vmatpush.bf16.msra.mxu0 %v560
    %628 = vmatpush.bf16.msra.mxu0 %v557
    %629 = vmatpush.bf16.msra.mxu0 %v554
    %630 = vmatpush.bf16.msra.mxu0 %v551
    %631 = vmatmul.bf16.gmra.mxu0 %v428
    %v632 = vpop.f32.mrf.mxu0
    %v633 = vadd.f32 %v465, %v632
    %v634 = vpop.f32.mrf.mxu0
    %635 = vdwg.mxu0
    %v636 = vmul.f32 %v620, 0.5
    %v637 = vtanh.pop %v636
    %v638 = vmul.f32 %v637, 0.5
    %v639 = vadd.f32 %v638, 0.5
    %v640 = vpack.c.bf16 %v633, %v633
    %v641 = vld [vmem:[#allocation13] sm:$0xf]
    %v642 = vld [vmem:[#allocation13 + $0x4] sm:$0xf]
    %v643 = vld [vmem:[#allocation13 + $0x8] sm:$0xf]
    %v644 = vld [vmem:[#allocation13 + $0xc] sm:$0xf]
    %v645 = vld [vmem:[#allocation13 + $0x10] sm:$0xf]
    %v646 = vld [vmem:[#allocation13 + $0x14] sm:$0xf]
    %v647 = vld [vmem:[#allocation13 + $0x18] sm:$0xf]
    %v648 = vld [vmem:[#allocation13 + $0x1c] sm:$0xf]
    %v649 = vld [vmem:[#allocation13 + $0x20] sm:$0xf]
    %v650 = vld [vmem:[#allocation13 + $0x24] sm:$0xf]
    %v651 = vld [vmem:[#allocation13 + $0x28] sm:$0xf]
    %v652 = vld [vmem:[#allocation13 + $0x2c] sm:$0xf]
    %v653 = vld [vmem:[#allocation13 + $0x30] sm:$0xf]
    %v654 = vld [vmem:[#allocation13 + $0x34] sm:$0xf]
    %v655 = vld [vmem:[#allocation13 + $0x38] sm:$0xf]
    %v656 = vld [vmem:[#allocation13 + $0x3c] sm:$0xf]
    %v673 = vunpack.c.l.b16 %v641
    %v674 = vunpack.c.l.b16 %v642
    %v675 = vunpack.c.l.b16 %v643
    %v676 = vunpack.c.l.b16 %v644
    %v677 = vunpack.c.l.b16 %v645
    %v678 = vunpack.c.l.b16 %v646
    %v679 = vunpack.c.l.b16 %v647
    %v680 = vunpack.c.l.b16 %v648
    %v681 = vunpack.c.l.b16 %v649
    %v682 = vunpack.c.l.b16 %v650
    %v683 = vunpack.c.l.b16 %v651
    %v684 = vunpack.c.l.b16 %v652
    %v685 = vunpack.c.l.b16 %v653
    %v686 = vunpack.c.l.b16 %v654
    %v687 = vunpack.c.l.b16 %v655
    %v688 = vunpack.c.l.b16 %v656
    %v689 = vpack.c.b16 %v674, %v673
    %v690 = vpack.c.b16 %v676, %v675
    %v691 = vpack.c.b16 %v678, %v677
    %v692 = vpack.c.b16 %v680, %v679
    %v693 = vpack.c.b16 %v682, %v681
    %v694 = vpack.c.b16 %v684, %v683
    %v695 = vpack.c.b16 %v686, %v685
    %v696 = vpack.c.b16 %v688, %v687
    %705 = vmatpush.bf16.msra.mxu0 %v696
    %706 = vmatpush.bf16.msra.mxu0 %v695
    %707 = vmatpush.bf16.msra.mxu0 %v694
    %708 = vmatpush.bf16.msra.mxu0 %v693
    %709 = vmatpush.bf16.msra.mxu0 %v692
    %710 = vmatpush.bf16.msra.mxu0 %v691
    %711 = vmatpush.bf16.msra.mxu0 %v690
    %712 = vmatpush.bf16.msra.mxu0 %v689
    %713 = vmatmul.bf16.gmra.mxu0 %v640
    %v714 = vpop.f32.mrf.mxu0
    %v715 = vadd.f32 0.0, %v714
    %v716 = vpop.f32.mrf.mxu0
    %717 = vdwg.mxu0
    %v718 = vmul.f32 %v715, %v639
    %v719 = vadd.f32 %v607, %v718
    %v720 = vadd.f32 %v719, %v134
    %v721 = vpack.c.bf16 %v720, %v720
    %s722 = scalar_lea.vmem [#allocation5], 192
    %v723 = vld [vmem:[%s722] sm:$0xff]
    %v724 = vld [vmem:[%s722 + $0x8] sm:$0xf]
    %v725 = vld [vmem:[%s722 + $0xc] sm:$0xff]
    %v726 = vld [vmem:[%s722 + $0x14] sm:$0xf]
    %v727 = vld [vmem:[%s722 + $0x18] sm:$0xff]
    %v728 = vld [vmem:[%s722 + $0x20] sm:$0xf]
    %v729 = vld [vmem:[%s722 + $0x24] sm:$0xff]
    %v730 = vld [vmem:[%s722 + $0x2c] sm:$0xf]
    %v731 = vld [vmem:[%s722 + $0x30] sm:$0xff]
    %v732 = vld [vmem:[%s722 + $0x38] sm:$0xf]
    %v733 = vld [vmem:[%s722 + $0x3c] sm:$0xff]
    %v734 = vld [vmem:[%s722 + $0x44] sm:$0xf]
    %v735 = vld [vmem:[%s722 + $0x48] sm:$0xff]
    %v736 = vld [vmem:[%s722 + $0x50] sm:$0xf]
    %v737 = vld [vmem:[%s722 + $0x54] sm:$0xff]
    %v738 = vld [vmem:[%s722 + $0x5c] sm:$0xf]
    %v739 = vld [vmem:[%s722 + $0x60] sm:$0xff]
    %v740 = vld [vmem:[%s722 + $0x68] sm:$0xf]
    %v741 = vld [vmem:[%s722 + $0x6c] sm:$0xff]
    %v742 = vld [vmem:[%s722 + $0x74] sm:$0xf]
    %v743 = vld [vmem:[%s722 + $0x78] sm:$0xff]
    %v744 = vld [vmem:[%s722 + $0x80] sm:$0xf]
    %v745 = vld [vmem:[%s722 + $0x84] sm:$0xff]
    %v746 = vld [vmem:[%s722 + $0x8c] sm:$0xf]
    %v747 = vld [vmem:[%s722 + $0x90] sm:$0xff]
    %v748 = vld [vmem:[%s722 + $0x98] sm:$0xf]
    %v749 = vld [vmem:[%s722 + $0x9c] sm:$0xff]
    %v750 = vld [vmem:[%s722 + $0xa4] sm:$0xf]
    %v751 = vld [vmem:[%s722 + $0xa8] sm:$0xff]
    %v752 = vld [vmem:[%s722 + $0xb0] sm:$0xf]
    %v753 = vld [vmem:[%s722 + $0xb4] sm:$0xff]
    %v754 = vld [vmem:[%s722 + $0xbc] sm:$0xf]
    %s755 = scalar_lea.vmem [#allocation7], 3
    %v756 = vld [vmem:[%s755] sm:$0x7]
    %v758 = vperm.slane %v756, 0
    %v759 = vperm.slane %v756, 1
    %v760 = vperm.slane %v756, 2
    %v796 = vunpack.c.l.b16 %v723
    %v797 = vunpack.c.h.b16 %v723
    %v798 = vunpack.c.l.b16 %v724
    %v799 = vunpack.c.l.b16 %v725
    %v800 = vunpack.c.h.b16 %v725
    %v801 = vunpack.c.l.b16 %v726
    %v802 = vunpack.c.l.b16 %v727
    %v803 = vunpack.c.h.b16 %v727
    %v804 = vunpack.c.l.b16 %v728
    %v805 = vunpack.c.l.b16 %v729
    %v806 = vunpack.c.h.b16 %v729
    %v807 = vunpack.c.l.b16 %v730
    %v808 = vunpack.c.l.b16 %v731
    %v809 = vunpack.c.h.b16 %v731
    %v810 = vunpack.c.l.b16 %v732
    %v811 = vunpack.c.l.b16 %v733
    %v812 = vunpack.c.h.b16 %v733
    %v813 = vunpack.c.l.b16 %v734
    %v814 = vunpack.c.l.b16 %v735
    %v815 = vunpack.c.h.b16 %v735
    %v816 = vunpack.c.l.b16 %v736
    %v817 = vunpack.c.l.b16 %v737
    %v818 = vunpack.c.h.b16 %v737
    %v819 = vunpack.c.l.b16 %v738
    %v820 = vunpack.c.l.b16 %v739
    %v821 = vunpack.c.h.b16 %v739
    %v822 = vunpack.c.l.b16 %v740
    %v823 = vunpack.c.l.b16 %v741
    %v824 = vunpack.c.h.b16 %v741
    %v825 = vunpack.c.l.b16 %v742
    %v826 = vunpack.c.l.b16 %v743
    %v827 = vunpack.c.h.b16 %v743
    %v828 = vunpack.c.l.b16 %v744
    %v829 = vunpack.c.l.b16 %v745
    %v830 = vunpack.c.h.b16 %v745
    %v831 = vunpack.c.l.b16 %v746
    %v832 = vunpack.c.l.b16 %v747
    %v833 = vunpack.c.h.b16 %v747
    %v834 = vunpack.c.l.b16 %v748
    %v835 = vunpack.c.l.b16 %v749
    %v836 = vunpack.c.h.b16 %v749
    %v837 = vunpack.c.l.b16 %v750
    %v838 = vunpack.c.l.b16 %v751
    %v839 = vunpack.c.h.b16 %v751
    %v840 = vunpack.c.l.b16 %v752
    %v841 = vunpack.c.l.b16 %v753
    %v842 = vunpack.c.h.b16 %v753
    %v843 = vunpack.c.l.b16 %v754
    %v844 = vpack.c.b16 %v799, %v796
    %v845 = vpack.c.b16 %v800, %v797
    %v846 = vpack.c.b16 %v801, %v798
    %v847 = vpack.c.b16 %v805, %v802
    %v848 = vpack.c.b16 %v806, %v803
    %v849 = vpack.c.b16 %v807, %v804
    %v850 = vpack.c.b16 %v811, %v808
    %v851 = vpack.c.b16 %v812, %v809
    %v852 = vpack.c.b16 %v813, %v810
    %v853 = vpack.c.b16 %v817, %v814
    %v854 = vpack.c.b16 %v818, %v815
    %v855 = vpack.c.b16 %v819, %v816
    %v856 = vpack.c.b16 %v823, %v820
    %v857 = vpack.c.b16 %v824, %v821
    %v858 = vpack.c.b16 %v825, %v822
    %v859 = vpack.c.b16 %v829, %v826
    %v860 = vpack.c.b16 %v830, %v827
    %v861 = vpack.c.b16 %v831, %v828
    %v862 = vpack.c.b16 %v835, %v832
    %v863 = vpack.c.b16 %v836, %v833
    %v864 = vpack.c.b16 %v837, %v834
    %v865 = vpack.c.b16 %v841, %v838
    %v866 = vpack.c.b16 %v842, %v839
    %v867 = vpack.c.b16 %v843, %v840
    %892 = vmatpush.bf16.msra.mxu0 %v865
    %893 = vmatpush.bf16.msra.mxu0 %v862
    %894 = vmatpush.bf16.msra.mxu0 %v859
    %895 = vmatpush.bf16.msra.mxu0 %v856
    %896 = vmatpush.bf16.msra.mxu0 %v853
    %897 = vmatpush.bf16.msra.mxu0 %v850
    %898 = vmatpush.bf16.msra.mxu0 %v847
    %899 = vmatpush.bf16.msra.mxu0 %v844
    %900 = vmatmul.bf16.gmra.mxu0 %v721
    %v901 = vpop.f32.mrf.mxu0
    %v902 = vadd.f32 %v758, %v901
    %v903 = vpop.f32.mrf.mxu0
    %904 = vdwg.mxu0
    %905 = vmatpush.bf16.msra.mxu0 %v866
    %906 = vmatpush.bf16.msra.mxu0 %v863
    %907 = vmatpush.bf16.msra.mxu0 %v860
    %908 = vmatpush.bf16.msra.mxu0 %v857
    %909 = vmatpush.bf16.msra.mxu0 %v854
    %910 = vmatpush.bf16.msra.mxu0 %v851
    %911 = vmatpush.bf16.msra.mxu0 %v848
    %912 = vmatpush.bf16.msra.mxu0 %v845
    %913 = vmatmul.bf16.gmra.mxu0 %v721
    %v914 = vpop.f32.mrf.mxu0
    %v915 = vadd.f32 %v759, %v914
    %v916 = vpop.f32.mrf.mxu0
    %917 = vdwg.mxu0
    %918 = vmatpush.bf16.msra.mxu0 %v867
    %919 = vmatpush.bf16.msra.mxu0 %v864
    %920 = vmatpush.bf16.msra.mxu0 %v861
    %921 = vmatpush.bf16.msra.mxu0 %v858
    %922 = vmatpush.bf16.msra.mxu0 %v855
    %923 = vmatpush.bf16.msra.mxu0 %v852
    %924 = vmatpush.bf16.msra.mxu0 %v849
    %925 = vmatpush.bf16.msra.mxu0 %v846
    %926 = vmatmul.bf16.gmra.mxu0 %v721
    %v927 = vpop.f32.mrf.mxu0
    %v928 = vadd.f32 %v760, %v927
    %v929 = vpop.f32.mrf.mxu0
    %930 = vdwg.mxu0
    %v931 = vmul.f32 %v915, 0.5
    %v932 = vtanh.pop %v931
    %v933 = vmul.f32 %v932, 0.5
    %v934 = vadd.f32 %v933, 0.5
    %v935 = vpack.c.bf16 %v928, %v928
    %s936 = scalar_lea.vmem [#allocation8], 64
    %v937 = vld [vmem:[%s936] sm:$0xf]
    %v938 = vld [vmem:[%s936 + $0x4] sm:$0xf]
    %v939 = vld [vmem:[%s936 + $0x8] sm:$0xf]
    %v940 = vld [vmem:[%s936 + $0xc] sm:$0xf]
    %v941 = vld [vmem:[%s936 + $0x10] sm:$0xf]
    %v942 = vld [vmem:[%s936 + $0x14] sm:$0xf]
    %v943 = vld [vmem:[%s936 + $0x18] sm:$0xf]
    %v944 = vld [vmem:[%s936 + $0x1c] sm:$0xf]
    %v945 = vld [vmem:[%s936 + $0x20] sm:$0xf]
    %v946 = vld [vmem:[%s936 + $0x24] sm:$0xf]
    %v947 = vld [vmem:[%s936 + $0x28] sm:$0xf]
    %v948 = vld [vmem:[%s936 + $0x2c] sm:$0xf]
    %v949 = vld [vmem:[%s936 + $0x30] sm:$0xf]
    %v950 = vld [vmem:[%s936 + $0x34] sm:$0xf]
    %v951 = vld [vmem:[%s936 + $0x38] sm:$0xf]
    %v952 = vld [vmem:[%s936 + $0x3c] sm:$0xf]
    %v969 = vunpack.c.l.b16 %v937
    %v970 = vunpack.c.l.b16 %v938
    %v971 = vunpack.c.l.b16 %v939
    %v972 = vunpack.c.l.b16 %v940
    %v973 = vunpack.c.l.b16 %v941
    %v974 = vunpack.c.l.b16 %v942
    %v975 = vunpack.c.l.b16 %v943
    %v976 = vunpack.c.l.b16 %v944
    %v977 = vunpack.c.l.b16 %v945
    %v978 = vunpack.c.l.b16 %v946
    %v979 = vunpack.c.l.b16 %v947
    %v980 = vunpack.c.l.b16 %v948
    %v981 = vunpack.c.l.b16 %v949
    %v982 = vunpack.c.l.b16 %v950
    %v983 = vunpack.c.l.b16 %v951
    %v984 = vunpack.c.l.b16 %v952
    %v985 = vpack.c.b16 %v970, %v969
    %v986 = vpack.c.b16 %v972, %v971
    %v987 = vpack.c.b16 %v974, %v973
    %v988 = vpack.c.b16 %v976, %v975
    %v989 = vpack.c.b16 %v978, %v977
    %v990 = vpack.c.b16 %v980, %v979
    %v991 = vpack.c.b16 %v982, %v981
    %v992 = vpack.c.b16 %v984, %v983
    %1001 = vmatpush.bf16.msra.mxu0 %v992
    %1002 = vmatpush.bf16.msra.mxu0 %v991
    %1003 = vmatpush.bf16.msra.mxu0 %v990
    %1004 = vmatpush.bf16.msra.mxu0 %v989
    %1005 = vmatpush.bf16.msra.mxu0 %v988
    %1006 = vmatpush.bf16.msra.mxu0 %v987
    %1007 = vmatpush.bf16.msra.mxu0 %v986
    %1008 = vmatpush.bf16.msra.mxu0 %v985
    %1009 = vmatmul.bf16.gmra.mxu0 %v935
    %v1010 = vpop.f32.mrf.mxu0
    %v1011 = vadd.f32 0.0, %v1010
    %v1012 = vpop.f32.mrf.mxu0
    %1013 = vdwg.mxu0
    %v1014 = vmul.f32 %v1011, %v934
    %v1015 = vadd.f32 %v902, %v1014
    %v1016 = vtanh.pop %v1015
    %v1017 = vpack.c.bf16 %v1016, %v1016
    %s1018 = scalar_lea.vmem [#allocation10], 192
    %v1019 = vld [vmem:[%s1018] sm:$0xff]
    %v1020 = vld [vmem:[%s1018 + $0x8] sm:$0xf]
    %v1021 = vld [vmem:[%s1018 + $0xc] sm:$0xff]
    %v1022 = vld [vmem:[%s1018 + $0x14] sm:$0xf]
    %v1023 = vld [vmem:[%s1018 + $0x18] sm:$0xff]
    %v1024 = vld [vmem:[%s1018 + $0x20] sm:$0xf]
    %v1025 = vld [vmem:[%s1018 + $0x24] sm:$0xff]
    %v1026 = vld [vmem:[%s1018 + $0x2c] sm:$0xf]
    %v1027 = vld [vmem:[%s1018 + $0x30] sm:$0xff]
    %v1028 = vld [vmem:[%s1018 + $0x38] sm:$0xf]
    %v1029 = vld [vmem:[%s1018 + $0x3c] sm:$0xff]
    %v1030 = vld [vmem:[%s1018 + $0x44] sm:$0xf]
    %v1031 = vld [vmem:[%s1018 + $0x48] sm:$0xff]
    %v1032 = vld [vmem:[%s1018 + $0x50] sm:$0xf]
    %v1033 = vld [vmem:[%s1018 + $0x54] sm:$0xff]
    %v1034 = vld [vmem:[%s1018 + $0x5c] sm:$0xf]
    %v1035 = vld [vmem:[%s1018 + $0x60] sm:$0xff]
    %v1036 = vld [vmem:[%s1018 + $0x68] sm:$0xf]
    %v1037 = vld [vmem:[%s1018 + $0x6c] sm:$0xff]
    %v1038 = vld [vmem:[%s1018 + $0x74] sm:$0xf]
    %v1039 = vld [vmem:[%s1018 + $0x78] sm:$0xff]
    %v1040 = vld [vmem:[%s1018 + $0x80] sm:$0xf]
    %v1041 = vld [vmem:[%s1018 + $0x84] sm:$0xff]
    %v1042 = vld [vmem:[%s1018 + $0x8c] sm:$0xf]
    %v1043 = vld [vmem:[%s1018 + $0x90] sm:$0xff]
    %v1044 = vld [vmem:[%s1018 + $0x98] sm:$0xf]
    %v1045 = vld [vmem:[%s1018 + $0x9c] sm:$0xff]
    %v1046 = vld [vmem:[%s1018 + $0xa4] sm:$0xf]
    %v1047 = vld [vmem:[%s1018 + $0xa8] sm:$0xff]
    %v1048 = vld [vmem:[%s1018 + $0xb0] sm:$0xf]
    %v1049 = vld [vmem:[%s1018 + $0xb4] sm:$0xff]
    %v1050 = vld [vmem:[%s1018 + $0xbc] sm:$0xf]
    %s1051 = scalar_lea.vmem [#allocation11], 3
    %v1052 = vld [vmem:[%s1051] sm:$0x7]
    %v1054 = vperm.slane %v1052, 0
    %v1055 = vperm.slane %v1052, 1
    %v1056 = vperm.slane %v1052, 2
    %v1092 = vunpack.c.l.b16 %v1019
    %v1093 = vunpack.c.h.b16 %v1019
    %v1094 = vunpack.c.l.b16 %v1020
    %v1095 = vunpack.c.l.b16 %v1021
    %v1096 = vunpack.c.h.b16 %v1021
    %v1097 = vunpack.c.l.b16 %v1022
    %v1098 = vunpack.c.l.b16 %v1023
    %v1099 = vunpack.c.h.b16 %v1023
    %v1100 = vunpack.c.l.b16 %v1024
    %v1101 = vunpack.c.l.b16 %v1025
    %v1102 = vunpack.c.h.b16 %v1025
    %v1103 = vunpack.c.l.b16 %v1026
    %v1104 = vunpack.c.l.b16 %v1027
    %v1105 = vunpack.c.h.b16 %v1027
    %v1106 = vunpack.c.l.b16 %v1028
    %v1107 = vunpack.c.l.b16 %v1029
    %v1108 = vunpack.c.h.b16 %v1029
    %v1109 = vunpack.c.l.b16 %v1030
    %v1110 = vunpack.c.l.b16 %v1031
    %v1111 = vunpack.c.h.b16 %v1031
    %v1112 = vunpack.c.l.b16 %v1032
    %v1113 = vunpack.c.l.b16 %v1033
    %v1114 = vunpack.c.h.b16 %v1033
    %v1115 = vunpack.c.l.b16 %v1034
    %v1116 = vunpack.c.l.b16 %v1035
    %v1117 = vunpack.c.h.b16 %v1035
    %v1118 = vunpack.c.l.b16 %v1036
    %v1119 = vunpack.c.l.b16 %v1037
    %v1120 = vunpack.c.h.b16 %v1037
    %v1121 = vunpack.c.l.b16 %v1038
    %v1122 = vunpack.c.l.b16 %v1039
    %v1123 = vunpack.c.h.b16 %v1039
    %v1124 = vunpack.c.l.b16 %v1040
    %v1125 = vunpack.c.l.b16 %v1041
    %v1126 = vunpack.c.h.b16 %v1041
    %v1127 = vunpack.c.l.b16 %v1042
    %v1128 = vunpack.c.l.b16 %v1043
    %v1129 = vunpack.c.h.b16 %v1043
    %v1130 = vunpack.c.l.b16 %v1044
    %v1131 = vunpack.c.l.b16 %v1045
    %v1132 = vunpack.c.h.b16 %v1045
    %v1133 = vunpack.c.l.b16 %v1046
    %v1134 = vunpack.c.l.b16 %v1047
    %v1135 = vunpack.c.h.b16 %v1047
    %v1136 = vunpack.c.l.b16 %v1048
    %v1137 = vunpack.c.l.b16 %v1049
    %v1138 = vunpack.c.h.b16 %v1049
    %v1139 = vunpack.c.l.b16 %v1050
    %v1140 = vpack.c.b16 %v1095, %v1092
    %v1141 = vpack.c.b16 %v1096, %v1093
    %v1142 = vpack.c.b16 %v1097, %v1094
    %v1143 = vpack.c.b16 %v1101, %v1098
    %v1144 = vpack.c.b16 %v1102, %v1099
    %v1145 = vpack.c.b16 %v1103, %v1100
    %v1146 = vpack.c.b16 %v1107, %v1104
    %v1147 = vpack.c.b16 %v1108, %v1105
    %v1148 = vpack.c.b16 %v1109, %v1106
    %v1149 = vpack.c.b16 %v1113, %v1110
    %v1150 = vpack.c.b16 %v1114, %v1111
    %v1151 = vpack.c.b16 %v1115, %v1112
    %v1152 = vpack.c.b16 %v1119, %v1116
    %v1153 = vpack.c.b16 %v1120, %v1117
    %v1154 = vpack.c.b16 %v1121, %v1118
    %v1155 = vpack.c.b16 %v1125, %v1122
    %v1156 = vpack.c.b16 %v1126, %v1123
    %v1157 = vpack.c.b16 %v1127, %v1124
    %v1158 = vpack.c.b16 %v1131, %v1128
    %v1159 = vpack.c.b16 %v1132, %v1129
    %v1160 = vpack.c.b16 %v1133, %v1130
    %v1161 = vpack.c.b16 %v1137, %v1134
    %v1162 = vpack.c.b16 %v1138, %v1135
    %v1163 = vpack.c.b16 %v1139, %v1136
    %1188 = vmatpush.bf16.msra.mxu0 %v1161
    %1189 = vmatpush.bf16.msra.mxu0 %v1158
    %1190 = vmatpush.bf16.msra.mxu0 %v1155
    %1191 = vmatpush.bf16.msra.mxu0 %v1152
    %1192 = vmatpush.bf16.msra.mxu0 %v1149
    %1193 = vmatpush.bf16.msra.mxu0 %v1146
    %1194 = vmatpush.bf16.msra.mxu0 %v1143
    %1195 = vmatpush.bf16.msra.mxu0 %v1140
    %1196 = vmatmul.bf16.gmra.mxu0 %v1017
    %v1197 = vpop.f32.mrf.mxu0
    %v1198 = vadd.f32 %v1054, %v1197
    %v1199 = vpop.f32.mrf.mxu0
    %1200 = vdwg.mxu0
    %1201 = vmatpush.bf16.msra.mxu0 %v1162
    %1202 = vmatpush.bf16.msra.mxu0 %v1159
    %1203 = vmatpush.bf16.msra.mxu0 %v1156
    %1204 = vmatpush.bf16.msra.mxu0 %v1153
    %1205 = vmatpush.bf16.msra.mxu0 %v1150
    %1206 = vmatpush.bf16.msra.mxu0 %v1147
    %1207 = vmatpush.bf16.msra.mxu0 %v1144
    %1208 = vmatpush.bf16.msra.mxu0 %v1141
    %1209 = vmatmul.bf16.gmra.mxu0 %v1017
    %v1210 = vpop.f32.mrf.mxu0
    %v1211 = vadd.f32 %v1055, %v1210
    %v1212 = vpop.f32.mrf.mxu0
    %1213 = vdwg.mxu0
    %1214 = vmatpush.bf16.msra.mxu0 %v1163
    %1215 = vmatpush.bf16.msra.mxu0 %v1160
    %1216 = vmatpush.bf16.msra.mxu0 %v1157
    %1217 = vmatpush.bf16.msra.mxu0 %v1154
    %1218 = vmatpush.bf16.msra.mxu0 %v1151
    %1219 = vmatpush.bf16.msra.mxu0 %v1148
    %1220 = vmatpush.bf16.msra.mxu0 %v1145
    %1221 = vmatpush.bf16.msra.mxu0 %v1142
    %1222 = vmatmul.bf16.gmra.mxu0 %v1017
    %v1223 = vpop.f32.mrf.mxu0
    %v1224 = vadd.f32 %v1056, %v1223
    %v1225 = vpop.f32.mrf.mxu0
    %1226 = vdwg.mxu0
    %v1227 = vmul.f32 %v1211, 0.5
    %v1228 = vtanh.pop %v1227
    %v1229 = vmul.f32 %v1228, 0.5
    %v1230 = vadd.f32 %v1229, 0.5
    %v1231 = vpack.c.bf16 %v1224, %v1224
    %s1232 = scalar_lea.vmem [#allocation13], 64
    %v1233 = vld [vmem:[%s1232] sm:$0xf]
    %v1234 = vld [vmem:[%s1232 + $0x4] sm:$0xf]
    %v1235 = vld [vmem:[%s1232 + $0x8] sm:$0xf]
    %v1236 = vld [vmem:[%s1232 + $0xc] sm:$0xf]
    %v1237 = vld [vmem:[%s1232 + $0x10] sm:$0xf]
    %v1238 = vld [vmem:[%s1232 + $0x14] sm:$0xf]
    %v1239 = vld [vmem:[%s1232 + $0x18] sm:$0xf]
    %v1240 = vld [vmem:[%s1232 + $0x1c] sm:$0xf]
    %v1241 = vld [vmem:[%s1232 + $0x20] sm:$0xf]
    %v1242 = vld [vmem:[%s1232 + $0x24] sm:$0xf]
    %v1243 = vld [vmem:[%s1232 + $0x28] sm:$0xf]
    %v1244 = vld [vmem:[%s1232 + $0x2c] sm:$0xf]
    %v1245 = vld [vmem:[%s1232 + $0x30] sm:$0xf]
    %v1246 = vld [vmem:[%s1232 + $0x34] sm:$0xf]
    %v1247 = vld [vmem:[%s1232 + $0x38] sm:$0xf]
    %v1248 = vld [vmem:[%s1232 + $0x3c] sm:$0xf]
    %v1265 = vunpack.c.l.b16 %v1233
    %v1266 = vunpack.c.l.b16 %v1234
    %v1267 = vunpack.c.l.b16 %v1235
    %v1268 = vunpack.c.l.b16 %v1236
    %v1269 = vunpack.c.l.b16 %v1237
    %v1270 = vunpack.c.l.b16 %v1238
    %v1271 = vunpack.c.l.b16 %v1239
    %v1272 = vunpack.c.l.b16 %v1240
    %v1273 = vunpack.c.l.b16 %v1241
    %v1274 = vunpack.c.l.b16 %v1242
    %v1275 = vunpack.c.l.b16 %v1243
    %v1276 = vunpack.c.l.b16 %v1244
    %v1277 = vunpack.c.l.b16 %v1245
    %v1278 = vunpack.c.l.b16 %v1246
    %v1279 = vunpack.c.l.b16 %v1247
    %v1280 = vunpack.c.l.b16 %v1248
    %v1281 = vpack.c.b16 %v1266, %v1265
    %v1282 = vpack.c.b16 %v1268, %v1267
    %v1283 = vpack.c.b16 %v1270, %v1269
    %v1284 = vpack.c.b16 %v1272, %v1271
    %v1285 = vpack.c.b16 %v1274, %v1273
    %v1286 = vpack.c.b16 %v1276, %v1275
    %v1287 = vpack.c.b16 %v1278, %v1277
    %v1288 = vpack.c.b16 %v1280, %v1279
    %1297 = vmatpush.bf16.msra.mxu0 %v1288
    %1298 = vmatpush.bf16.msra.mxu0 %v1287
    %1299 = vmatpush.bf16.msra.mxu0 %v1286
    %1300 = vmatpush.bf16.msra.mxu0 %v1285
    %1301 = vmatpush.bf16.msra.mxu0 %v1284
    %1302 = vmatpush.bf16.msra.mxu0 %v1283
    %1303 = vmatpush.bf16.msra.mxu0 %v1282
    %1304 = vmatpush.bf16.msra.mxu0 %v1281
    %1305 = vmatmul.bf16.gmra.mxu0 %v1231
    %v1306 = vpop.f32.mrf.mxu0
    %v1307 = vadd.f32 0.0, %v1306
    %v1308 = vpop.f32.mrf.mxu0
    %1309 = vdwg.mxu0
    %v1310 = vmul.f32 %v1307, %v1230
    %v1311 = vadd.f32 %v1198, %v1310
    %v1312 = vadd.f32 %v1311, %v720
    %v1313 = vpack.c.bf16 %v1312, %v1312
    %s1314 = scalar_lea.vmem [#allocation5], 384
    %v1315 = vld [vmem:[%s1314] sm:$0xff]
    %v1316 = vld [vmem:[%s1314 + $0x8] sm:$0xf]
    %v1317 = vld [vmem:[%s1314 + $0xc] sm:$0xff]
    %v1318 = vld [vmem:[%s1314 + $0x14] sm:$0xf]
    %v1319 = vld [vmem:[%s1314 + $0x18] sm:$0xff]
    %v1320 = vld [vmem:[%s1314 + $0x20] sm:$0xf]
    %v1321 = vld [vmem:[%s1314 + $0x24] sm:$0xff]
    %v1322 = vld [vmem:[%s1314 + $0x2c] sm:$0xf]
    %v1323 = vld [vmem:[%s1314 + $0x30] sm:$0xff]
    %v1324 = vld [vmem:[%s1314 + $0x38] sm:$0xf]
    %v1325 = vld [vmem:[%s1314 + $0x3c] sm:$0xff]
    %v1326 = vld [vmem:[%s1314 + $0x44] sm:$0xf]
    %v1327 = vld [vmem:[%s1314 + $0x48] sm:$0xff]
    %v1328 = vld [vmem:[%s1314 + $0x50] sm:$0xf]
    %v1329 = vld [vmem:[%s1314 + $0x54] sm:$0xff]
    %v1330 = vld [vmem:[%s1314 + $0x5c] sm:$0xf]
    %v1331 = vld [vmem:[%s1314 + $0x60] sm:$0xff]
    %v1332 = vld [vmem:[%s1314 + $0x68] sm:$0xf]
    %v1333 = vld [vmem:[%s1314 + $0x6c] sm:$0xff]
    %v1334 = vld [vmem:[%s1314 + $0x74] sm:$0xf]
    %v1335 = vld [vmem:[%s1314 + $0x78] sm:$0xff]
    %v1336 = vld [vmem:[%s1314 + $0x80] sm:$0xf]
    %v1337 = vld [vmem:[%s1314 + $0x84] sm:$0xff]
    %v1338 = vld [vmem:[%s1314 + $0x8c] sm:$0xf]
    %v1339 = vld [vmem:[%s1314 + $0x90] sm:$0xff]
    %v1340 = vld [vmem:[%s1314 + $0x98] sm:$0xf]
    %v1341 = vld [vmem:[%s1314 + $0x9c] sm:$0xff]
    %v1342 = vld [vmem:[%s1314 + $0xa4] sm:$0xf]
    %v1343 = vld [vmem:[%s1314 + $0xa8] sm:$0xff]
    %v1344 = vld [vmem:[%s1314 + $0xb0] sm:$0xf]
    %v1345 = vld [vmem:[%s1314 + $0xb4] sm:$0xff]
    %v1346 = vld [vmem:[%s1314 + $0xbc] sm:$0xf]
    %s1347 = scalar_lea.vmem [#allocation7], 6
    %v1348 = vld [vmem:[%s1347] sm:$0x7]
    %v1350 = vperm.slane %v1348, 0
    %v1351 = vperm.slane %v1348, 1
    %v1352 = vperm.slane %v1348, 2
    %v1388 = vunpack.c.l.b16 %v1315
    %v1389 = vunpack.c.h.b16 %v1315
    %v1390 = vunpack.c.l.b16 %v1316
    %v1391 = vunpack.c.l.b16 %v1317
    %v1392 = vunpack.c.h.b16 %v1317
    %v1393 = vunpack.c.l.b16 %v1318
    %v1394 = vunpack.c.l.b16 %v1319
    %v1395 = vunpack.c.h.b16 %v1319
    %v1396 = vunpack.c.l.b16 %v1320
    %v1397 = vunpack.c.l.b16 %v1321
    %v1398 = vunpack.c.h.b16 %v1321
    %v1399 = vunpack.c.l.b16 %v1322
    %v1400 = vunpack.c.l.b16 %v1323
    %v1401 = vunpack.c.h.b16 %v1323
    %v1402 = vunpack.c.l.b16 %v1324
    %v1403 = vunpack.c.l.b16 %v1325
    %v1404 = vunpack.c.h.b16 %v1325
    %v1405 = vunpack.c.l.b16 %v1326
    %v1406 = vunpack.c.l.b16 %v1327
    %v1407 = vunpack.c.h.b16 %v1327
    %v1408 = vunpack.c.l.b16 %v1328
    %v1409 = vunpack.c.l.b16 %v1329
    %v1410 = vunpack.c.h.b16 %v1329
    %v1411 = vunpack.c.l.b16 %v1330
    %v1412 = vunpack.c.l.b16 %v1331
    %v1413 = vunpack.c.h.b16 %v1331
    %v1414 = vunpack.c.l.b16 %v1332
    %v1415 = vunpack.c.l.b16 %v1333
    %v1416 = vunpack.c.h.b16 %v1333
    %v1417 = vunpack.c.l.b16 %v1334
    %v1418 = vunpack.c.l.b16 %v1335
    %v1419 = vunpack.c.h.b16 %v1335
    %v1420 = vunpack.c.l.b16 %v1336
    %v1421 = vunpack.c.l.b16 %v1337
    %v1422 = vunpack.c.h.b16 %v1337
    %v1423 = vunpack.c.l.b16 %v1338
    %v1424 = vunpack.c.l.b16 %v1339
    %v1425 = vunpack.c.h.b16 %v1339
    %v1426 = vunpack.c.l.b16 %v1340
    %v1427 = vunpack.c.l.b16 %v1341
    %v1428 = vunpack.c.h.b16 %v1341
    %v1429 = vunpack.c.l.b16 %v1342
    %v1430 = vunpack.c.l.b16 %v1343
    %v1431 = vunpack.c.h.b16 %v1343
    %v1432 = vunpack.c.l.b16 %v1344
    %v1433 = vunpack.c.l.b16 %v1345
    %v1434 = vunpack.c.h.b16 %v1345
    %v1435 = vunpack.c.l.b16 %v1346
    %v1436 = vpack.c.b16 %v1391, %v1388
    %v1437 = vpack.c.b16 %v1392, %v1389
    %v1438 = vpack.c.b16 %v1393, %v1390
    %v1439 = vpack.c.b16 %v1397, %v1394
    %v1440 = vpack.c.b16 %v1398, %v1395
    %v1441 = vpack.c.b16 %v1399, %v1396
    %v1442 = vpack.c.b16 %v1403, %v1400
    %v1443 = vpack.c.b16 %v1404, %v1401
    %v1444 = vpack.c.b16 %v1405, %v1402
    %v1445 = vpack.c.b16 %v1409, %v1406
    %v1446 = vpack.c.b16 %v1410, %v1407
    %v1447 = vpack.c.b16 %v1411, %v1408
    %v1448 = vpack.c.b16 %v1415, %v1412
    %v1449 = vpack.c.b16 %v1416, %v1413
    %v1450 = vpack.c.b16 %v1417, %v1414
    %v1451 = vpack.c.b16 %v1421, %v1418
    %v1452 = vpack.c.b16 %v1422, %v1419
    %v1453 = vpack.c.b16 %v1423, %v1420
    %v1454 = vpack.c.b16 %v1427, %v1424
    %v1455 = vpack.c.b16 %v1428, %v1425
    %v1456 = vpack.c.b16 %v1429, %v1426
    %v1457 = vpack.c.b16 %v1433, %v1430
    %v1458 = vpack.c.b16 %v1434, %v1431
    %v1459 = vpack.c.b16 %v1435, %v1432
    %1484 = vmatpush.bf16.msra.mxu0 %v1457
    %1485 = vmatpush.bf16.msra.mxu0 %v1454
    %1486 = vmatpush.bf16.msra.mxu0 %v1451
    %1487 = vmatpush.bf16.msra.mxu0 %v1448
    %1488 = vmatpush.bf16.msra.mxu0 %v1445
    %1489 = vmatpush.bf16.msra.mxu0 %v1442
    %1490 = vmatpush.bf16.msra.mxu0 %v1439
    %1491 = vmatpush.bf16.msra.mxu0 %v1436
    %1492 = vmatmul.bf16.gmra.mxu0 %v1313
    %v1493 = vpop.f32.mrf.mxu0
    %v1494 = vadd.f32 %v1350, %v1493
    %v1495 = vpop.f32.mrf.mxu0
    %1496 = vdwg.mxu0
    %1497 = vmatpush.bf16.msra.mxu0 %v1458
    %1498 = vmatpush.bf16.msra.mxu0 %v1455
    %1499 = vmatpush.bf16.msra.mxu0 %v1452
    %1500 = vmatpush.bf16.msra.mxu0 %v1449
    %1501 = vmatpush.bf16.msra.mxu0 %v1446
    %1502 = vmatpush.bf16.msra.mxu0 %v1443
    %1503 = vmatpush.bf16.msra.mxu0 %v1440
    %1504 = vmatpush.bf16.msra.mxu0 %v1437
    %1505 = vmatmul.bf16.gmra.mxu0 %v1313
    %v1506 = vpop.f32.mrf.mxu0
    %v1507 = vadd.f32 %v1351, %v1506
    %v1508 = vpop.f32.mrf.mxu0
    %1509 = vdwg.mxu0
    %1510 = vmatpush.bf16.msra.mxu0 %v1459
    %1511 = vmatpush.bf16.msra.mxu0 %v1456
    %1512 = vmatpush.bf16.msra.mxu0 %v1453
    %1513 = vmatpush.bf16.msra.mxu0 %v1450
    %1514 = vmatpush.bf16.msra.mxu0 %v1447
    %1515 = vmatpush.bf16.msra.mxu0 %v1444
    %1516 = vmatpush.bf16.msra.mxu0 %v1441
    %1517 = vmatpush.bf16.msra.mxu0 %v1438
    %1518 = vmatmul.bf16.gmra.mxu0 %v1313
    %v1519 = vpop.f32.mrf.mxu0
    %v1520 = vadd.f32 %v1352, %v1519
    %v1521 = vpop.f32.mrf.mxu0
    %1522 = vdwg.mxu0
    %v1523 = vmul.f32 %v1507, 0.5
    %v1524 = vtanh.pop %v1523
    %v1525 = vmul.f32 %v1524, 0.5
    %v1526 = vadd.f32 %v1525, 0.5
    %v1527 = vpack.c.bf16 %v1520, %v1520
    %s1528 = scalar_lea.vmem [#allocation8], 128
    %v1529 = vld [vmem:[%s1528] sm:$0xf]
    %v1530 = vld [vmem:[%s1528 + $0x4] sm:$0xf]
    %v1531 = vld [vmem:[%s1528 + $0x8] sm:$0xf]
    %v1532 = vld [vmem:[%s1528 + $0xc] sm:$0xf]
    %v1533 = vld [vmem:[%s1528 + $0x10] sm:$0xf]
    %v1534 = vld [vmem:[%s1528 + $0x14] sm:$0xf]
    %v1535 = vld [vmem:[%s1528 + $0x18] sm:$0xf]
    %v1536 = vld [vmem:[%s1528 + $0x1c] sm:$0xf]
    %v1537 = vld [vmem:[%s1528 + $0x20] sm:$0xf]
    %v1538 = vld [vmem:[%s1528 + $0x24] sm:$0xf]
    %v1539 = vld [vmem:[%s1528 + $0x28] sm:$0xf]
    %v1540 = vld [vmem:[%s1528 + $0x2c] sm:$0xf]
    %v1541 = vld [vmem:[%s1528 + $0x30] sm:$0xf]
    %v1542 = vld [vmem:[%s1528 + $0x34] sm:$0xf]
    %v1543 = vld [vmem:[%s1528 + $0x38] sm:$0xf]
    %v1544 = vld [vmem:[%s1528 + $0x3c] sm:$0xf]
    %v1561 = vunpack.c.l.b16 %v1529
    %v1562 = vunpack.c.l.b16 %v1530
    %v1563 = vunpack.c.l.b16 %v1531
    %v1564 = vunpack.c.l.b16 %v1532
    %v1565 = vunpack.c.l.b16 %v1533
    %v1566 = vunpack.c.l.b16 %v1534
    %v1567 = vunpack.c.l.b16 %v1535
    %v1568 = vunpack.c.l.b16 %v1536
    %v1569 = vunpack.c.l.b16 %v1537
    %v1570 = vunpack.c.l.b16 %v1538
    %v1571 = vunpack.c.l.b16 %v1539
    %v1572 = vunpack.c.l.b16 %v1540
    %v1573 = vunpack.c.l.b16 %v1541
    %v1574 = vunpack.c.l.b16 %v1542
    %v1575 = vunpack.c.l.b16 %v1543
    %v1576 = vunpack.c.l.b16 %v1544
    %v1577 = vpack.c.b16 %v1562, %v1561
    %v1578 = vpack.c.b16 %v1564, %v1563
    %v1579 = vpack.c.b16 %v1566, %v1565
    %v1580 = vpack.c.b16 %v1568, %v1567
    %v1581 = vpack.c.b16 %v1570, %v1569
    %v1582 = vpack.c.b16 %v1572, %v1571
    %v1583 = vpack.c.b16 %v1574, %v1573
    %v1584 = vpack.c.b16 %v1576, %v1575
    %1593 = vmatpush.bf16.msra.mxu0 %v1584
    %1594 = vmatpush.bf16.msra.mxu0 %v1583
    %1595 = vmatpush.bf16.msra.mxu0 %v1582
    %1596 = vmatpush.bf16.msra.mxu0 %v1581
    %1597 = vmatpush.bf16.msra.mxu0 %v1580
    %1598 = vmatpush.bf16.msra.mxu0 %v1579
    %1599 = vmatpush.bf16.msra.mxu0 %v1578
    %1600 = vmatpush.bf16.msra.mxu0 %v1577
    %1601 = vmatmul.bf16.gmra.mxu0 %v1527
    %v1602 = vpop.f32.mrf.mxu0
    %v1603 = vadd.f32 0.0, %v1602
    %v1604 = vpop.f32.mrf.mxu0
    %1605 = vdwg.mxu0
    %v1606 = vmul.f32 %v1603, %v1526
    %v1607 = vadd.f32 %v1494, %v1606
    %v1608 = vtanh.pop %v1607
    %v1609 = vpack.c.bf16 %v1608, %v1608
    %s1610 = scalar_lea.vmem [#allocation10], 384
    %v1611 = vld [vmem:[%s1610] sm:$0xff]
    %v1612 = vld [vmem:[%s1610 + $0x8] sm:$0xf]
    %v1613 = vld [vmem:[%s1610 + $0xc] sm:$0xff]
    %v1614 = vld [vmem:[%s1610 + $0x14] sm:$0xf]
    %v1615 = vld [vmem:[%s1610 + $0x18] sm:$0xff]
    %v1616 = vld [vmem:[%s1610 + $0x20] sm:$0xf]
    %v1617 = vld [vmem:[%s1610 + $0x24] sm:$0xff]
    %v1618 = vld [vmem:[%s1610 + $0x2c] sm:$0xf]
    %v1619 = vld [vmem:[%s1610 + $0x30] sm:$0xff]
    %v1620 = vld [vmem:[%s1610 + $0x38] sm:$0xf]
    %v1621 = vld [vmem:[%s1610 + $0x3c] sm:$0xff]
    %v1622 = vld [vmem:[%s1610 + $0x44] sm:$0xf]
    %v1623 = vld [vmem:[%s1610 + $0x48] sm:$0xff]
    %v1624 = vld [vmem:[%s1610 + $0x50] sm:$0xf]
    %v1625 = vld [vmem:[%s1610 + $0x54] sm:$0xff]
    %v1626 = vld [vmem:[%s1610 + $0x5c] sm:$0xf]
    %v1627 = vld [vmem:[%s1610 + $0x60] sm:$0xff]
    %v1628 = vld [vmem:[%s1610 + $0x68] sm:$0xf]
    %v1629 = vld [vmem:[%s1610 + $0x6c] sm:$0xff]
    %v1630 = vld [vmem:[%s1610 + $0x74] sm:$0xf]
    %v1631 = vld [vmem:[%s1610 + $0x78] sm:$0xff]
    %v1632 = vld [vmem:[%s1610 + $0x80] sm:$0xf]
    %v1633 = vld [vmem:[%s1610 + $0x84] sm:$0xff]
    %v1634 = vld [vmem:[%s1610 + $0x8c] sm:$0xf]
    %v1635 = vld [vmem:[%s1610 + $0x90] sm:$0xff]
    %v1636 = vld [vmem:[%s1610 + $0x98] sm:$0xf]
    %v1637 = vld [vmem:[%s1610 + $0x9c] sm:$0xff]
    %v1638 = vld [vmem:[%s1610 + $0xa4] sm:$0xf]
    %v1639 = vld [vmem:[%s1610 + $0xa8] sm:$0xff]
    %v1640 = vld [vmem:[%s1610 + $0xb0] sm:$0xf]
    %v1641 = vld [vmem:[%s1610 + $0xb4] sm:$0xff]
    %v1642 = vld [vmem:[%s1610 + $0xbc] sm:$0xf]
    %s1643 = scalar_lea.vmem [#allocation11], 6
    %v1644 = vld [vmem:[%s1643] sm:$0x7]
    %v1646 = vperm.slane %v1644, 0
    %v1647 = vperm.slane %v1644, 1
    %v1648 = vperm.slane %v1644, 2
    %v1684 = vunpack.c.l.b16 %v1611
    %v1685 = vunpack.c.h.b16 %v1611
    %v1686 = vunpack.c.l.b16 %v1612
    %v1687 = vunpack.c.l.b16 %v1613
    %v1688 = vunpack.c.h.b16 %v1613
    %v1689 = vunpack.c.l.b16 %v1614
    %v1690 = vunpack.c.l.b16 %v1615
    %v1691 = vunpack.c.h.b16 %v1615
    %v1692 = vunpack.c.l.b16 %v1616
    %v1693 = vunpack.c.l.b16 %v1617
    %v1694 = vunpack.c.h.b16 %v1617
    %v1695 = vunpack.c.l.b16 %v1618
    %v1696 = vunpack.c.l.b16 %v1619
    %v1697 = vunpack.c.h.b16 %v1619
    %v1698 = vunpack.c.l.b16 %v1620
    %v1699 = vunpack.c.l.b16 %v1621
    %v1700 = vunpack.c.h.b16 %v1621
    %v1701 = vunpack.c.l.b16 %v1622
    %v1702 = vunpack.c.l.b16 %v1623
    %v1703 = vunpack.c.h.b16 %v1623
    %v1704 = vunpack.c.l.b16 %v1624
    %v1705 = vunpack.c.l.b16 %v1625
    %v1706 = vunpack.c.h.b16 %v1625
    %v1707 = vunpack.c.l.b16 %v1626
    %v1708 = vunpack.c.l.b16 %v1627
    %v1709 = vunpack.c.h.b16 %v1627
    %v1710 = vunpack.c.l.b16 %v1628
    %v1711 = vunpack.c.l.b16 %v1629
    %v1712 = vunpack.c.h.b16 %v1629
    %v1713 = vunpack.c.l.b16 %v1630
    %v1714 = vunpack.c.l.b16 %v1631
    %v1715 = vunpack.c.h.b16 %v1631
    %v1716 = vunpack.c.l.b16 %v1632
    %v1717 = vunpack.c.l.b16 %v1633
    %v1718 = vunpack.c.h.b16 %v1633
    %v1719 = vunpack.c.l.b16 %v1634
    %v1720 = vunpack.c.l.b16 %v1635
    %v1721 = vunpack.c.h.b16 %v1635
    %v1722 = vunpack.c.l.b16 %v1636
    %v1723 = vunpack.c.l.b16 %v1637
    %v1724 = vunpack.c.h.b16 %v1637
    %v1725 = vunpack.c.l.b16 %v1638
    %v1726 = vunpack.c.l.b16 %v1639
    %v1727 = vunpack.c.h.b16 %v1639
    %v1728 = vunpack.c.l.b16 %v1640
    %v1729 = vunpack.c.l.b16 %v1641
    %v1730 = vunpack.c.h.b16 %v1641
    %v1731 = vunpack.c.l.b16 %v1642
    %v1732 = vpack.c.b16 %v1687, %v1684
    %v1733 = vpack.c.b16 %v1688, %v1685
    %v1734 = vpack.c.b16 %v1689, %v1686
    %v1735 = vpack.c.b16 %v1693, %v1690
    %v1736 = vpack.c.b16 %v1694, %v1691
    %v1737 = vpack.c.b16 %v1695, %v1692
    %v1738 = vpack.c.b16 %v1699, %v1696
    %v1739 = vpack.c.b16 %v1700, %v1697
    %v1740 = vpack.c.b16 %v1701, %v1698
    %v1741 = vpack.c.b16 %v1705, %v1702
    %v1742 = vpack.c.b16 %v1706, %v1703
    %v1743 = vpack.c.b16 %v1707, %v1704
    %v1744 = vpack.c.b16 %v1711, %v1708
    %v1745 = vpack.c.b16 %v1712, %v1709
    %v1746 = vpack.c.b16 %v1713, %v1710
    %v1747 = vpack.c.b16 %v1717, %v1714
    %v1748 = vpack.c.b16 %v1718, %v1715
    %v1749 = vpack.c.b16 %v1719, %v1716
    %v1750 = vpack.c.b16 %v1723, %v1720
    %v1751 = vpack.c.b16 %v1724, %v1721
    %v1752 = vpack.c.b16 %v1725, %v1722
    %v1753 = vpack.c.b16 %v1729, %v1726
    %v1754 = vpack.c.b16 %v1730, %v1727
    %v1755 = vpack.c.b16 %v1731, %v1728
    %1780 = vmatpush.bf16.msra.mxu0 %v1753
    %1781 = vmatpush.bf16.msra.mxu0 %v1750
    %1782 = vmatpush.bf16.msra.mxu0 %v1747
    %1783 = vmatpush.bf16.msra.mxu0 %v1744
    %1784 = vmatpush.bf16.msra.mxu0 %v1741
    %1785 = vmatpush.bf16.msra.mxu0 %v1738
    %1786 = vmatpush.bf16.msra.mxu0 %v1735
    %1787 = vmatpush.bf16.msra.mxu0 %v1732
    %1788 = vmatmul.bf16.gmra.mxu0 %v1609
    %v1789 = vpop.f32.mrf.mxu0
    %v1790 = vadd.f32 %v1646, %v1789
    %v1791 = vpop.f32.mrf.mxu0
    %1792 = vdwg.mxu0
    %1793 = vmatpush.bf16.msra.mxu0 %v1754
    %1794 = vmatpush.bf16.msra.mxu0 %v1751
    %1795 = vmatpush.bf16.msra.mxu0 %v1748
    %1796 = vmatpush.bf16.msra.mxu0 %v1745
    %1797 = vmatpush.bf16.msra.mxu0 %v1742
    %1798 = vmatpush.bf16.msra.mxu0 %v1739
    %1799 = vmatpush.bf16.msra.mxu0 %v1736
    %1800 = vmatpush.bf16.msra.mxu0 %v1733
    %1801 = vmatmul.bf16.gmra.mxu0 %v1609
    %v1802 = vpop.f32.mrf.mxu0
    %v1803 = vadd.f32 %v1647, %v1802
    %v1804 = vpop.f32.mrf.mxu0
    %1805 = vdwg.mxu0
    %1806 = vmatpush.bf16.msra.mxu0 %v1755
    %1807 = vmatpush.bf16.msra.mxu0 %v1752
    %1808 = vmatpush.bf16.msra.mxu0 %v1749
    %1809 = vmatpush.bf16.msra.mxu0 %v1746
    %1810 = vmatpush.bf16.msra.mxu0 %v1743
    %1811 = vmatpush.bf16.msra.mxu0 %v1740
    %1812 = vmatpush.bf16.msra.mxu0 %v1737
    %1813 = vmatpush.bf16.msra.mxu0 %v1734
    %1814 = vmatmul.bf16.gmra.mxu0 %v1609
    %v1815 = vpop.f32.mrf.mxu0
    %v1816 = vadd.f32 %v1648, %v1815
    %v1817 = vpop.f32.mrf.mxu0
    %1818 = vdwg.mxu0
    %v1819 = vmul.f32 %v1803, 0.5
    %v1820 = vtanh.pop %v1819
    %v1821 = vmul.f32 %v1820, 0.5
    %v1822 = vadd.f32 %v1821, 0.5
    %v1823 = vpack.c.bf16 %v1816, %v1816
    %s1824 = scalar_lea.vmem [#allocation13], 128
    %v1825 = vld [vmem:[%s1824] sm:$0xf]
    %v1826 = vld [vmem:[%s1824 + $0x4] sm:$0xf]
    %v1827 = vld [vmem:[%s1824 + $0x8] sm:$0xf]
    %v1828 = vld [vmem:[%s1824 + $0xc] sm:$0xf]
    %v1829 = vld [vmem:[%s1824 + $0x10] sm:$0xf]
    %v1830 = vld [vmem:[%s1824 + $0x14] sm:$0xf]
    %v1831 = vld [vmem:[%s1824 + $0x18] sm:$0xf]
    %v1832 = vld [vmem:[%s1824 + $0x1c] sm:$0xf]
    %v1833 = vld [vmem:[%s1824 + $0x20] sm:$0xf]
    %v1834 = vld [vmem:[%s1824 + $0x24] sm:$0xf]
    %v1835 = vld [vmem:[%s1824 + $0x28] sm:$0xf]
    %v1836 = vld [vmem:[%s1824 + $0x2c] sm:$0xf]
    %v1837 = vld [vmem:[%s1824 + $0x30] sm:$0xf]
    %v1838 = vld [vmem:[%s1824 + $0x34] sm:$0xf]
    %v1839 = vld [vmem:[%s1824 + $0x38] sm:$0xf]
    %v1840 = vld [vmem:[%s1824 + $0x3c] sm:$0xf]
    %v1857 = vunpack.c.l.b16 %v1825
    %v1858 = vunpack.c.l.b16 %v1826
    %v1859 = vunpack.c.l.b16 %v1827
    %v1860 = vunpack.c.l.b16 %v1828
    %v1861 = vunpack.c.l.b16 %v1829
    %v1862 = vunpack.c.l.b16 %v1830
    %v1863 = vunpack.c.l.b16 %v1831
    %v1864 = vunpack.c.l.b16 %v1832
    %v1865 = vunpack.c.l.b16 %v1833
    %v1866 = vunpack.c.l.b16 %v1834
    %v1867 = vunpack.c.l.b16 %v1835
    %v1868 = vunpack.c.l.b16 %v1836
    %v1869 = vunpack.c.l.b16 %v1837
    %v1870 = vunpack.c.l.b16 %v1838
    %v1871 = vunpack.c.l.b16 %v1839
    %v1872 = vunpack.c.l.b16 %v1840
    %v1873 = vpack.c.b16 %v1858, %v1857
    %v1874 = vpack.c.b16 %v1860, %v1859
    %v1875 = vpack.c.b16 %v1862, %v1861
    %v1876 = vpack.c.b16 %v1864, %v1863
    %v1877 = vpack.c.b16 %v1866, %v1865
    %v1878 = vpack.c.b16 %v1868, %v1867
    %v1879 = vpack.c.b16 %v1870, %v1869
    %v1880 = vpack.c.b16 %v1872, %v1871
    %1889 = vmatpush.bf16.msra.mxu0 %v1880
    %1890 = vmatpush.bf16.msra.mxu0 %v1879
    %1891 = vmatpush.bf16.msra.mxu0 %v1878
    %1892 = vmatpush.bf16.msra.mxu0 %v1877
    %1893 = vmatpush.bf16.msra.mxu0 %v1876
    %1894 = vmatpush.bf16.msra.mxu0 %v1875
    %1895 = vmatpush.bf16.msra.mxu0 %v1874
    %1896 = vmatpush.bf16.msra.mxu0 %v1873
    %1897 = vmatmul.bf16.gmra.mxu0 %v1823
    %v1898 = vpop.f32.mrf.mxu0
    %v1899 = vadd.f32 0.0, %v1898
    %v1900 = vpop.f32.mrf.mxu0
    %1901 = vdwg.mxu0
    %v1902 = vmul.f32 %v1899, %v1822
    %v1903 = vadd.f32 %v1790, %v1902
    %v1904 = vadd.f32 %v1903, %v1312
    %1905 = vst [vmem:[#allocation14] sm:$0xff] %v1904
    // Predicated region
    $region58: #{tpu_custom_call.1} parent=1 // pred_check
      _
    $region59: #{tpu_custom_call.1} parent=1 // pred_check_branch
      %1907 = sbr.rel (0) target = $region61
    $region60: #{tpu_custom_call.1} parent=1 // pred_region
      %1909 = vsyncadd [#allocation4], 0
      %s1911 = sshll.u32 [#allocation14], 4
      %s1912 = int_to_ptr.vmem [resolvable:$true] %s1911
      %s1913 = sshll.u32 %s7, 4
      %s1914 = int_to_ptr.hbm [resolvable:$true] %s1913
      %1916 = dma.vmem_to_hbm [thread:$0]  %s1912, 128, %s1914, [#allocation4]
    $region61: #{tpu_custom_call.1} parent=1 // pred_fallthru
      _
    // Predicated region
    $region62: #{tpu_custom_call.1} parent=1 // pred_check
      _
    $region63: #{tpu_custom_call.1} parent=1 // pred_check_branch
      %1918 = sbr.rel (0) target = $region65
    $region64: #{tpu_custom_call.1} parent=1 // pred_region
      %1920 = dma.done [#allocation4], 128
    $region65: #{tpu_custom_call.1} parent=1 // pred_fallthru
      _
    %1921 = vsyncpa [#allocation3], 1
    %1922 = vsyncpa [#allocation6], 1
    %1923 = vsyncpa [#allocation9], 1
    %1924 = vsyncpa [#allocation12], 1
    %1925 = vsyncpa [#allocation4], 1

</llo_original>
